<compile_context>
chip_gen: v6e
topology: v6e:2x2x1
jax: 0.10.0
libtpu: 0.0.40
codegen_flags: <defaults>
</compile_context>

<pallas_src>
import functools

import jax
import jax.numpy as jnp
from jax import lax
from jax.experimental import pallas as pl
from jax.experimental.pallas import tpu as pltpu


# ----------------------------------------------------------------------------
# Fused kernel (bc path):
#   zsum_k  = S_k @ Z                      (S built on the fly from assign indices)
#   h_k     = (x_k + zsum_k) @ W
#   acc    += A[i, k] @ h_k                (accumulated over the contraction grid axis)
# ----------------------------------------------------------------------------
def _bc_fused_kernel(scales, x_ref, assign_ref, z_ref, a_ref, w_ref, o_ref, acc_ref):
    kk = pl.program_id(1)

    @pl.when(kk == 0)
    def _():
        acc_ref[...] = jnp.zeros_like(acc_ref)

    tk = x_ref.shape[0]
    m = z_ref.shape[0]

    # Build the weighted one-hot selection matrix S: (tk, M).  scales are static
    # Python floats (kset[s]/N), so the loop fully unrolls (nseg = k-1 is tiny).
    idx = assign_ref[...]                                      # (tk, nseg) int32
    iota_m = lax.broadcasted_iota(jnp.int32, (tk, m), 1)
    sel = jnp.zeros((tk, m), jnp.float32)
    for s, sc in enumerate(scales):
        sel = sel + jnp.where(idx[:, s:s + 1] == iota_m, jnp.float32(sc), 0.0)

    # Gather-as-matmul on the MXU (exact: each row of `sel` has <= nseg nonzeros).
    zsum = jnp.dot(sel, z_ref[...], preferred_element_type=jnp.float32)   # (tk, Fin)

    # Elementwise add stays f32 (v5e-safe); cast only for the MXU matmuls.
    h = jnp.dot((x_ref[...] + zsum).astype(w_ref.dtype), w_ref[...],
                preferred_element_type=jnp.float32)                       # (tk, Fout)
    acc_ref[...] += jnp.dot(a_ref[...], h.astype(a_ref.dtype),
                            preferred_element_type=jnp.float32)           # (tm, Fout)

    @pl.when(kk == pl.num_programs(1) - 1)
    def _():
        o_ref[...] = acc_ref[...].astype(o_ref.dtype)


# ----------------------------------------------------------------------------
# Fused kernel (no-bc path):  out = A_norm @ (x @ W)
# ----------------------------------------------------------------------------
def _plain_fused_kernel(x_ref, a_ref, w_ref, o_ref, acc_ref):
    kk = pl.program_id(1)

    @pl.when(kk == 0)
    def _():
        acc_ref[...] = jnp.zeros_like(acc_ref)

    h = jnp.dot(x_ref[...].astype(w_ref.dtype), w_ref[...],
                preferred_element_type=jnp.float32)
    acc_ref[...] += jnp.dot(a_ref[...], h.astype(a_ref.dtype),
                            preferred_element_type=jnp.float32)

    @pl.when(kk == pl.num_programs(1) - 1)
    def _():
        o_ref[...] = acc_ref[...].astype(o_ref.dtype)


# ----------------------------------------------------------------------------
# Glue
# ----------------------------------------------------------------------------
def gcn_norm_adj(edge_index, n_nodes):
    A = jnp.zeros((n_nodes, n_nodes), jnp.float32)
    A = A.at[edge_index[0], edge_index[1]].set(1.0)
    A = A + jnp.eye(n_nodes, dtype=jnp.float32)
    deg = A.sum(axis=1)
    d_inv_sqrt = 1.0 / jnp.sqrt(deg)
    return A * d_inv_sqrt[:, None] * d_inv_sqrt[None, :]


def init_params(key, dimWX, k):
    """Deterministic init of all submodule weights declared in __init__ (most unused in forward)."""
    Fin, Fout = dimWX
    keys = jax.random.split(key, 6)

    def glorot(kk, shape):
        lim = jnp.sqrt(6.0 / (shape[0] + shape[1]))
        return jax.random.uniform(kk, shape, jnp.float32, -lim, lim)

    return {
        "baselayer1_W": glorot(keys[0], (Fin, Fout)),
        "baselayer6_W": glorot(keys[1], (Fin * k, Fout)),
        "baselayer7_W": glorot(keys[2], (Fin, Fout)),
        "baselayer8_W": glorot(keys[3], (Fin * (k - 1), Fout)),
        "baselayer10_W": glorot(keys[4], (Fin * (k - 1), Fout)),
        "lin1_W": glorot(keys[5], (2 * Fout, Fout)),   # torch.nn.Linear(2*Fout, Fout, bias=False)
    }


def bcmp_layer3_forward(params, x, edge_index, bc_feature=None, bc_assigment=None,
                        k=None, kset=(), *, block=256, compute_dtype=jnp.float32):
    """Forward pass of BCMPLayer3 (GCNConv-concretized BaseLayer), fused Pallas kernel.

    block:          row/contraction tile (multiple of 128; 256 suits v6e/v7x MXU).
    compute_dtype:  dtype fed to the A_norm / W MXU matmuls (f32 or bf16);
                    accumulation is always f32.
    """
    N, Fin = x.shape
    W = params["baselayer7_W"]
    Fout = W.shape[1]
    a_norm = gcn_norm_adj(edge_index, N)

    # Pad node count to the tile size (padded A rows/cols are zero -> exact result).
    Np = ((N + block - 1) // block) * block
    tm = tk = block
    pad_n = Np - N

    x_p = jnp.pad(x.astype(jnp.float32), ((0, pad_n), (0, 0)))
    a_p = jnp.pad(a_norm, ((0, pad_n), (0, pad_n))).astype(compute_dtype)
    w_c = W.astype(compute_dtype)

    grid = (Np // tm, Np // tk)
    out_shape = jax.ShapeDtypeStruct((Np, Fout), jnp.float32)
    out_spec = pl.BlockSpec((tm, Fout), lambda i, kk: (i, 0))
    scratch = [pltpu.VMEM((tm, Fout), jnp.float32)]
    cparams = pltpu.CompilerParams(
        dimension_semantics=("parallel", "arbitrary"))

    use_bc = not (bc_assigment is None and bc_feature is None)
    if use_bc:
        nseg = k - 1
        # kset and N are static -> bake the per-segment scales into the kernel.
        scales = tuple(float(kset[s]) / float(N) for s in range(nseg))
        # NOTE: float->int32 cast of indices is exact only for indices < 2^24 (plenty here).
        assign_nt = bc_assigment[: nseg * N].astype(jnp.int32).reshape(nseg, N).T  # (N, nseg)
        assign_p = jnp.pad(assign_nt, ((0, pad_n), (0, 0)))       # padded rows -> index 0 (harmless)
        z_f32 = bc_feature.astype(jnp.float32)
        M = z_f32.shape[0]

        out = pl.pallas_call(
            functools.partial(_bc_fused_kernel, scales),
            out_shape=out_shape,
            grid_spec=pltpu.PrefetchScalarGridSpec(
                num_scalar_prefetch=0,
                grid=grid,
                in_specs=[
                    pl.BlockSpec((tk, Fin), lambda i, kk: (kk, 0)),    # x rows (contraction blk)
                    pl.BlockSpec((tk, nseg), lambda i, kk: (kk, 0)),   # assign rows
                    pl.BlockSpec((M, Fin), lambda i, kk: (0, 0)),      # Z resident in VMEM
                    pl.BlockSpec((tm, tk), lambda i, kk: (i, kk)),     # A_norm tile
                    pl.BlockSpec((Fin, Fout), lambda i, kk: (0, 0)),   # W resident in VMEM
                ],
                out_specs=out_spec,
                scratch_shapes=scratch),
            compiler_params=cparams,
        )(x_p, assign_p, z_f32, a_p, w_c)
    else:
        out = pl.pallas_call(
            _plain_fused_kernel,
            out_shape=out_shape,
            grid_spec=pltpu.PrefetchScalarGridSpec(
                num_scalar_prefetch=0,
                grid=grid,
                in_specs=[
                    pl.BlockSpec((tk, Fin), lambda i, kk: (kk, 0)),
                    pl.BlockSpec((tm, tk), lambda i, kk: (i, kk)),
                    pl.BlockSpec((Fin, Fout), lambda i, kk: (0, 0)),
                ],
                out_specs=out_spec,
                scratch_shapes=scratch),
            compiler_params=cparams,
        )(x_p, a_p, w_c)

    return out[:N]


# ----------------------------------------------------------------------------
# Pure-JAX reference (mirrors the PyTorch forward literally)
# ----------------------------------------------------------------------------
def reference_forward(params, x, edge_index, bc_feature=None, bc_assigment=None,
                      k=None, kset=()):
    N = x.shape[0]
    a_norm = gcn_norm_adj(edge_index, N)
    if bc_assigment is None and bc_feature is None:
        h = x
    else:
        idx = bc_assigment.astype(jnp.int32)
        z = bc_feature[idx[:N]] / (N / kset[0])
        for j in range(k - 2):
            z = z + bc_feature[idx[(j + 1) * N:(j + 2) * N]] / (N / kset[j + 1])
        h = x + z
    return a_norm @ (h @ params["baselayer7_W"])


if __name__ == "__main__":
    key = jax.random.PRNGKey(0)
    N, Fin, Fout = 16, 8, 32          # dimWX = (Fin, Fout)
    k = 3
    kset = [4, 4]                     # needs k-1 entries
    M = 8                             # number of bc_feature rows

    kx, kz, ka, kp = jax.random.split(key, 4)
    x = jax.random.normal(kx, (N, Fin), jnp.float32)
    Z = jax.random.normal(kz, (M, Fin), jnp.float32)
    # like PyTorch: assignment comes in as float, cast to long/int32 for indexing
    bc_assigment = jax.random.randint(ka, ((k - 1) * N,), 0, M, jnp.int32).astype(jnp.float32)

    # small ring graph (both directions)
    src = jnp.arange(N, dtype=jnp.int32)
    dst = (src + 1) % N
    edge_index = jnp.stack(
        [jnp.concatenate([src, dst]), jnp.concatenate([dst, src])]
    )

    params = init_params(kp, (Fin, Fout), k)

    # branch with bc features (the interesting path), f32 compute
    out = bcmp_layer3_forward(params, x, edge_index, bc_feature=Z,
                              bc_assigment=bc_assigment, k=k, kset=kset)
    out = jax.block_until_ready(out)
    ref = reference_forward(params, x, edge_index, bc_feature=Z,
                            bc_assigment=bc_assigment, k=k, kset=kset)
    assert out.shape == (N, Fout)
    assert jnp.allclose(out, ref, atol=1e-4, rtol=1e-4)

    # branch without bc features
    out2 = jax.block_until_ready(bcmp_layer3_forward(params, x, edge_index))
    ref2 = reference_forward(params, x, edge_index)
    assert jnp.allclose(out2, ref2, atol=1e-4, rtol=1e-4)

    # bf16 MXU path (v6e/v7x fast path), loose tolerance
    out_bf16 = jax.block_until_ready(
        bcmp_layer3_forward(params, x, edge_index, bc_feature=Z,
                            bc_assigment=bc_assigment, k=k, kset=kset,
                            compute_dtype=jnp.bfloat16))
    assert jnp.allclose(out_bf16, ref, atol=1e-1, rtol=1e-1)

    print("KERNEL_OK")
</pallas_src>

<mosaic_0001>
module attributes {stable_mosaic.version = 11 : i64} {
  func.func @_bc_fused_kernel(%arg0: i32, %arg1: i32, %arg2: memref<256x8xf32, #tpu.memory_space<vmem>>, %arg3: memref<256x2xi32, #tpu.memory_space<vmem>>, %arg4: memref<8x8xf32, #tpu.memory_space<vmem>>, %arg5: memref<256x256xf32, #tpu.memory_space<vmem>>, %arg6: memref<8x32xf32, #tpu.memory_space<vmem>>, %arg7: memref<256x32xf32, #tpu.memory_space<vmem>>, %arg8: memref<256x32xf32, #tpu.memory_space<vmem>>) attributes {dimension_semantics = [#tpu.dimension_semantics<parallel>, #tpu.dimension_semantics<arbitrary>], iteration_bounds = array<i64: 1, 1>, scalar_prefetch = 0 : i64, scratch_operands = 1 : i64, tpu.core_type = #tpu.core_type<tc>, window_params = [{transform_indices = @transform_0, window_bounds = array<i64: 256, 8>}, {transform_indices = @transform_1, window_bounds = array<i64: 256, 2>}, {pipeline_mode = #tpu.pipeline_mode<synchronous>, transform_indices = @transform_2, window_bounds = array<i64: 8, 8>}, {transform_indices = @transform_3, window_bounds = array<i64: 256, 256>}, {pipeline_mode = #tpu.pipeline_mode<synchronous>, transform_indices = @transform_4, window_bounds = array<i64: 8, 32>}, {transform_indices = @transform_5, window_bounds = array<i64: 256, 32>}]} {
    %c0_i32 = arith.constant 0 : i32
    %0 = arith.cmpi eq, %arg1, %c0_i32 : i32
    %1 = arith.extui %0 : i1 to i32
    %c0_i32_0 = arith.constant 0 : i32
    %2 = arith.cmpi ne, %1, %c0_i32_0 : i32
    scf.if %2 {
      %cst_23 = arith.constant 0.000000e+00 : f32
      %34 = vector.broadcast %cst_23 : f32 to vector<256x32xf32>
      %c0_24 = arith.constant 0 : index
      %c0_25 = arith.constant 0 : index
      %35 = vector.load %arg8[%c0_24, %c0_25] : memref<256x32xf32, #tpu.memory_space<vmem>>, vector<256x32xf32>
      tpu.vector_store %arg8[%c0_24, %c0_25], %34 {strides = array<i32>} : memref<256x32xf32, #tpu.memory_space<vmem>>, vector<256x32xf32>,
    } else {
    }
    %c0 = arith.constant 0 : index
    %c0_1 = arith.constant 0 : index
    %3 = vector.load %arg3[%c0, %c0_1] : memref<256x2xi32, #tpu.memory_space<vmem>>, vector<256x2xi32>
    %4 = tpu.iota {dimensions = array<i32: 1>} : vector<256x8xi32>
    %cst = arith.constant 0.000000e+00 : f32
    %5 = vector.broadcast %cst : f32 to vector<256x8xf32>
    %6 = vector.extract_strided_slice %3 {offsets = [0, 0], sizes = [256, 1], strides = [1, 1]} : vector<256x2xi32> to vector<256x1xi32>
    %7 = vector.broadcast %6 : vector<256x1xi32> to vector<256x8xi32>
    %8 = arith.cmpi eq, %7, %4 : vector<256x8xi32>
    %cst_2 = arith.constant 2.500000e-01 : f32
    %cst_3 = arith.constant 0.000000e+00 : f32
    %9 = vector.broadcast %cst_2 : f32 to vector<256x8xf32>
    %10 = vector.broadcast %cst_3 : f32 to vector<256x8xf32>
    %11 = arith.select %8, %9, %10 : vector<256x8xi1>, vector<256x8xf32>
    %12 = arith.addf %5, %11 : vector<256x8xf32>
    %13 = vector.extract_strided_slice %3 {offsets = [0, 1], sizes = [256, 1], strides = [1, 1]} : vector<256x2xi32> to vector<256x1xi32>
    %14 = vector.broadcast %13 : vector<256x1xi32> to vector<256x8xi32>
    %15 = arith.cmpi eq, %14, %4 : vector<256x8xi32>
    %cst_4 = arith.constant 2.500000e-01 : f32
    %cst_5 = arith.constant 0.000000e+00 : f32
    %16 = vector.broadcast %cst_4 : f32 to vector<256x8xf32>
    %17 = vector.broadcast %cst_5 : f32 to vector<256x8xf32>
    %18 = arith.select %15, %16, %17 : vector<256x8xi1>, vector<256x8xf32>
    %19 = arith.addf %12, %18 : vector<256x8xf32>
    %c0_6 = arith.constant 0 : index
    %c0_7 = arith.constant 0 : index
    %20 = vector.load %arg4[%c0_6, %c0_7] : memref<8x8xf32, #tpu.memory_space<vmem>>, vector<8x8xf32>
    %cst_8 = arith.constant dense<0.000000e+00> : vector<256x8xf32>
    %21 = tpu.matmul %19, %20, %cst_8 {dimension_numbers = #tpu.dot_dimension_numbers<[1], [0], [0], [1], [0, 0, 1, 1], [], []>} : vector<256x8xf32>, vector<8x8xf32>, vector<256x8xf32> -> vector<256x8xf32>
    %c0_9 = arith.constant 0 : index
    %c0_10 = arith.constant 0 : index
    %22 = vector.load %arg2[%c0_9, %c0_10] : memref<256x8xf32, #tpu.memory_space<vmem>>, vector<256x8xf32>
    %23 = arith.addf %22, %21 : vector<256x8xf32>
    %c0_11 = arith.constant 0 : index
    %c0_12 = arith.constant 0 : index
    %24 = vector.load %arg6[%c0_11, %c0_12] : memref<8x32xf32, #tpu.memory_space<vmem>>, vector<8x32xf32>
    %cst_13 = arith.constant dense<0.000000e+00> : vector<256x32xf32>
    %25 = tpu.matmul %23, %24, %cst_13 {dimension_numbers = #tpu.dot_dimension_numbers<[1], [0], [0], [1], [0, 0, 1, 1], [], []>} : vector<256x8xf32>, vector<8x32xf32>, vector<256x32xf32> -> vector<256x32xf32>
    %c0_14 = arith.constant 0 : index
    %c0_15 = arith.constant 0 : index
    %26 = vector.load %arg8[%c0_14, %c0_15] : memref<256x32xf32, #tpu.memory_space<vmem>>, vector<256x32xf32>
    %c0_16 = arith.constant 0 : index
    %c0_17 = arith.constant 0 : index
    %27 = vector.load %arg5[%c0_16, %c0_17] : memref<256x256xf32, #tpu.memory_space<vmem>>, vector<256x256xf32>
    %cst_18 = arith.constant dense<0.000000e+00> : vector<256x32xf32>
    %28 = tpu.matmul %27, %25, %cst_18 {dimension_numbers = #tpu.dot_dimension_numbers<[1], [0], [0], [1], [0, 0, 1, 1], [], []>} : vector<256x256xf32>, vector<256x32xf32>, vector<256x32xf32> -> vector<256x32xf32>
    %29 = arith.addf %26, %28 : vector<256x32xf32>
    %c0_19 = arith.constant 0 : index
    %c0_20 = arith.constant 0 : index
    %30 = vector.load %arg8[%c0_19, %c0_20] : memref<256x32xf32, #tpu.memory_space<vmem>>, vector<256x32xf32>
    tpu.vector_store %arg8[%c0_19, %c0_20], %29 {strides = array<i32>} : memref<256x32xf32, #tpu.memory_space<vmem>>, vector<256x32xf32>,
    %c0_i32_21 = arith.constant 0 : i32
    %31 = arith.cmpi eq, %arg1, %c0_i32_21 : i32
    %32 = arith.extui %31 : i1 to i32
    %c0_i32_22 = arith.constant 0 : i32
    %33 = arith.cmpi ne, %32, %c0_i32_22 : i32
    scf.if %33 {
      %c0_23 = arith.constant 0 : index
      %c0_24 = arith.constant 0 : index
      %34 = vector.load %arg8[%c0_23, %c0_24] : memref<256x32xf32, #tpu.memory_space<vmem>>, vector<256x32xf32>
      %c0_25 = arith.constant 0 : index
      %c0_26 = arith.constant 0 : index
      %35 = vector.load %arg7[%c0_25, %c0_26] : memref<256x32xf32, #tpu.memory_space<vmem>>, vector<256x32xf32>
      tpu.vector_store %arg7[%c0_25, %c0_26], %34 {strides = array<i32>} : memref<256x32xf32, #tpu.memory_space<vmem>>, vector<256x32xf32>,
    } else {
    }
    return
  }
  func.func @transform_0(%arg0: i32, %arg1: i32) -> (i32, i32) {
    %c0_i32 = arith.constant 0 : i32
    %c0_i32_0 = arith.constant 0 : i32
    return %arg1, %c0_i32 : i32, i32
  }
  func.func @transform_1(%arg0: i32, %arg1: i32) -> (i32, i32) {
    %c0_i32 = arith.constant 0 : i32
    %c0_i32_0 = arith.constant 0 : i32
    return %arg1, %c0_i32 : i32, i32
  }
  func.func @transform_2(%arg0: i32, %arg1: i32) -> (i32, i32) {
    %c0_i32 = arith.constant 0 : i32
    %c0_i32_0 = arith.constant 0 : i32
    %c0_i32_1 = arith.constant 0 : i32
    return %c0_i32, %c0_i32_0 : i32, i32
  }
  func.func @transform_3(%arg0: i32, %arg1: i32) -> (i32, i32) {
    %c0_i32 = arith.constant 0 : i32
    return %arg0, %arg1 : i32, i32
  }
  func.func @transform_4(%arg0: i32, %arg1: i32) -> (i32, i32) {
    %c0_i32 = arith.constant 0 : i32
    %c0_i32_0 = arith.constant 0 : i32
    %c0_i32_1 = arith.constant 0 : i32
    return %c0_i32, %c0_i32_0 : i32, i32
  }
  func.func @transform_5(%arg0: i32, %arg1: i32) -> (i32, i32) {
    %c0_i32 = arith.constant 0 : i32
    %c0_i32_0 = arith.constant 0 : i32
    return %arg0, %c0_i32 : i32, i32
  }
}

</mosaic_0001>

<llo_original>
// kernel: tpu_custom_call.1
$region0: #{tpu_custom_call.1}
  #allocation0 [shape = 'u32[]', space=smem, size = 0x4, offset = 0x4, fixed_abs, tag = 'smem constant byte address 0x4 - core index']
  #allocation1 [shape = 'u32[144,128]{1,0:T(1,128)}', space=vmem, size = 0x12000, scoped, tag = 'internal scratch']
  #allocation2 [shape = 'f32[256,32]{1,0:T(8,128)}', space=vmem, size = 0x20000, scoped, tag = 'scratch operand']
  %s0 = inlined_call_operand.vmem [shape: f32[256,8], index: 0, kind: input, shape index: {}]
  %s1 = inlined_call_operand.vmem [shape: s32[256,2], index: 1, kind: input, shape index: {}]
  %s2 = inlined_call_operand.vmem [shape: f32[8,8], index: 2, kind: input, shape index: {}]
  %s3 = inlined_call_operand.vmem [shape: f32[256,256], index: 3, kind: input, shape index: {}]
  %s4 = inlined_call_operand.vmem [shape: f32[8,32], index: 4, kind: input, shape index: {}]
  %s5 = inlined_call_operand.vmem [shape: f32[256,32], index: 5, kind: output, shape index: {}]
  %s6 = sld [smem:[#allocation0]]
  $region38: #{tpu_custom_call.1} parent=0
    _
  %s8 = ssub.s32 1, %s6
  %s9 = scalar_select 0, %s8, %s6
  // Predicated region
  $region2: #{tpu_custom_call.1} parent=0 // pred_check
    _
  $region3: #{tpu_custom_call.1} parent=0 // pred_check_branch
    %11 = sbr.rel (0) target = $region5
  $region4: #{tpu_custom_call.1} parent=0 // pred_region
    _
  $region5: #{tpu_custom_call.1} parent=0 // pred_fallthru
    _
  // Predicated region
  $region6: #{tpu_custom_call.1} parent=0 // pred_check
    _
  $region7: #{tpu_custom_call.1} parent=0 // pred_check_branch
    %13 = sbr.rel (0) target = $region9
  $region8: #{tpu_custom_call.1} parent=0 // pred_region
    _
  $region9: #{tpu_custom_call.1} parent=0 // pred_fallthru
    _
  // Predicated region
  $region10: #{tpu_custom_call.1} parent=0 // pred_check
    _
  $region11: #{tpu_custom_call.1} parent=0 // pred_check_branch
    %15 = sbr.rel (0) target = $region13
  $region12: #{tpu_custom_call.1} parent=0 // pred_region
    _
  $region13: #{tpu_custom_call.1} parent=0 // pred_fallthru
    _
  // Predicated region
  $region14: #{tpu_custom_call.1} parent=0 // pred_check
    _
  $region15: #{tpu_custom_call.1} parent=0 // pred_check_branch
    %17 = sbr.rel (0) target = $region17
  $region16: #{tpu_custom_call.1} parent=0 // pred_region
    _
  $region17: #{tpu_custom_call.1} parent=0 // pred_fallthru
    _
  // Predicated region
  $region18: #{tpu_custom_call.1} parent=0 // pred_check
    _
  $region19: #{tpu_custom_call.1} parent=0 // pred_check_branch
    %19 = sbr.rel (0) target = $region21
  $region20: #{tpu_custom_call.1} parent=0 // pred_region
    _
  $region21: #{tpu_custom_call.1} parent=0 // pred_fallthru
    _
  %p20 = scmp.eq.s32.totalorder 0, 0
  // Predicated region
  $region22: #{tpu_custom_call.1} parent=0 // pred_check
    %p21 = pneg %p20
  $region23: #{tpu_custom_call.1} parent=0 // pred_check_branch
    %23 = sbr.rel (%p21) target = $region25
  $region24: #{tpu_custom_call.1} parent=0 // pred_region
    %vm24 = vcmask 261120
    %25 = vst.msk [vmem:[#allocation2] sm:$0xff] %vm24, 0.0
    %26 = vst.msk [vmem:[#allocation2 + $0x8] sm:$0xff] %vm24, 0.0
    %27 = vst.msk [vmem:[#allocation2 + $0x10] sm:$0xff] %vm24, 0.0
    %28 = vst.msk [vmem:[#allocation2 + $0x18] sm:$0xff] %vm24, 0.0
    %29 = vst.msk [vmem:[#allocation2 + $0x20] sm:$0xff] %vm24, 0.0
    %30 = vst.msk [vmem:[#allocation2 + $0x28] sm:$0xff] %vm24, 0.0
    %31 = vst.msk [vmem:[#allocation2 + $0x30] sm:$0xff] %vm24, 0.0
    %32 = vst.msk [vmem:[#allocation2 + $0x38] sm:$0xff] %vm24, 0.0
    %33 = vst.msk [vmem:[#allocation2 + $0x40] sm:$0xff] %vm24, 0.0
    %34 = vst.msk [vmem:[#allocation2 + $0x48] sm:$0xff] %vm24, 0.0
    %35 = vst.msk [vmem:[#allocation2 + $0x50] sm:$0xff] %vm24, 0.0
    %36 = vst.msk [vmem:[#allocation2 + $0x58] sm:$0xff] %vm24, 0.0
    %37 = vst.msk [vmem:[#allocation2 + $0x60] sm:$0xff] %vm24, 0.0
    %38 = vst.msk [vmem:[#allocation2 + $0x68] sm:$0xff] %vm24, 0.0
    %39 = vst.msk [vmem:[#allocation2 + $0x70] sm:$0xff] %vm24, 0.0
    %40 = vst.msk [vmem:[#allocation2 + $0x78] sm:$0xff] %vm24, 0.0
    %41 = vst.msk [vmem:[#allocation2 + $0x80] sm:$0xff] %vm24, 0.0
    %42 = vst.msk [vmem:[#allocation2 + $0x88] sm:$0xff] %vm24, 0.0
    %43 = vst.msk [vmem:[#allocation2 + $0x90] sm:$0xff] %vm24, 0.0
    %44 = vst.msk [vmem:[#allocation2 + $0x98] sm:$0xff] %vm24, 0.0
    %45 = vst.msk [vmem:[#allocation2 + $0xa0] sm:$0xff] %vm24, 0.0
    %46 = vst.msk [vmem:[#allocation2 + $0xa8] sm:$0xff] %vm24, 0.0
    %47 = vst.msk [vmem:[#allocation2 + $0xb0] sm:$0xff] %vm24, 0.0
    %48 = vst.msk [vmem:[#allocation2 + $0xb8] sm:$0xff] %vm24, 0.0
    %49 = vst.msk [vmem:[#allocation2 + $0xc0] sm:$0xff] %vm24, 0.0
    %50 = vst.msk [vmem:[#allocation2 + $0xc8] sm:$0xff] %vm24, 0.0
    %51 = vst.msk [vmem:[#allocation2 + $0xd0] sm:$0xff] %vm24, 0.0
    %52 = vst.msk [vmem:[#allocation2 + $0xd8] sm:$0xff] %vm24, 0.0
    %53 = vst.msk [vmem:[#allocation2 + $0xe0] sm:$0xff] %vm24, 0.0
    %54 = vst.msk [vmem:[#allocation2 + $0xe8] sm:$0xff] %vm24, 0.0
    %55 = vst.msk [vmem:[#allocation2 + $0xf0] sm:$0xff] %vm24, 0.0
    %56 = vst.msk [vmem:[#allocation2 + $0xf8] sm:$0xff] %vm24, 0.0
  $region25: #{tpu_custom_call.1} parent=0 // pred_fallthru
    _
  %v57 = vld [vmem:[%s1] sm:$0xff]
  %v58 = vld [vmem:[%s1 + $0x8] sm:$0xff]
  %v59 = vld [vmem:[%s1 + $0x10] sm:$0xff]
  %v60 = vld [vmem:[%s1 + $0x18] sm:$0xff]
  %v61 = vld [vmem:[%s1 + $0x20] sm:$0xff]
  %v62 = vld [vmem:[%s1 + $0x28] sm:$0xff]
  %v63 = vld [vmem:[%s1 + $0x30] sm:$0xff]
  %v64 = vld [vmem:[%s1 + $0x38] sm:$0xff]
  %v65 = vld [vmem:[%s1 + $0x40] sm:$0xff]
  %v66 = vld [vmem:[%s1 + $0x48] sm:$0xff]
  %v67 = vld [vmem:[%s1 + $0x50] sm:$0xff]
  %v68 = vld [vmem:[%s1 + $0x58] sm:$0xff]
  %v69 = vld [vmem:[%s1 + $0x60] sm:$0xff]
  %v70 = vld [vmem:[%s1 + $0x68] sm:$0xff]
  %v71 = vld [vmem:[%s1 + $0x70] sm:$0xff]
  %v72 = vld [vmem:[%s1 + $0x78] sm:$0xff]
  %v73 = vld [vmem:[%s1 + $0x80] sm:$0xff]
  %v74 = vld [vmem:[%s1 + $0x88] sm:$0xff]
  %v75 = vld [vmem:[%s1 + $0x90] sm:$0xff]
  %v76 = vld [vmem:[%s1 + $0x98] sm:$0xff]
  %v77 = vld [vmem:[%s1 + $0xa0] sm:$0xff]
  %v78 = vld [vmem:[%s1 + $0xa8] sm:$0xff]
  %v79 = vld [vmem:[%s1 + $0xb0] sm:$0xff]
  %v80 = vld [vmem:[%s1 + $0xb8] sm:$0xff]
  %v81 = vld [vmem:[%s1 + $0xc0] sm:$0xff]
  %v82 = vld [vmem:[%s1 + $0xc8] sm:$0xff]
  %v83 = vld [vmem:[%s1 + $0xd0] sm:$0xff]
  %v84 = vld [vmem:[%s1 + $0xd8] sm:$0xff]
  %v85 = vld [vmem:[%s1 + $0xe0] sm:$0xff]
  %v86 = vld [vmem:[%s1 + $0xe8] sm:$0xff]
  %v87 = vld [vmem:[%s1 + $0xf0] sm:$0xff]
  %v88 = vld [vmem:[%s1 + $0xf8] sm:$0xff]
  %v89 = vlaneseq
  %v90 = vand.u32 %v89, 127
  %91 = vset.pattern.permute.xlu0 0
  %92 = vperm.xlu0 %91, %v57
  %v93 = vpop.permute.xlu0 %92
  %94 = vset.pattern.permute.xlu0 0
  %95 = vperm.xlu0 %94, %v58
  %v96 = vpop.permute.xlu0 %95
  %97 = vset.pattern.permute.xlu0 0
  %98 = vperm.xlu0 %97, %v59
  %v99 = vpop.permute.xlu0 %98
  %100 = vset.pattern.permute.xlu0 0
  %101 = vperm.xlu0 %100, %v60
  %v102 = vpop.permute.xlu0 %101
  %103 = vset.pattern.permute.xlu0 0
  %104 = vperm.xlu0 %103, %v61
  %v105 = vpop.permute.xlu0 %104
  %106 = vset.pattern.permute.xlu0 0
  %107 = vperm.xlu0 %106, %v62
  %v108 = vpop.permute.xlu0 %107
  %109 = vset.pattern.permute.xlu0 0
  %110 = vperm.xlu0 %109, %v63
  %v111 = vpop.permute.xlu0 %110
  %112 = vset.pattern.permute.xlu0 0
  %113 = vperm.xlu0 %112, %v64
  %v114 = vpop.permute.xlu0 %113
  %115 = vset.pattern.permute.xlu0 0
  %116 = vperm.xlu0 %115, %v65
  %v117 = vpop.permute.xlu0 %116
  %118 = vset.pattern.permute.xlu0 0
  %119 = vperm.xlu0 %118, %v66
  %v120 = vpop.permute.xlu0 %119
  %121 = vset.pattern.permute.xlu0 0
  %122 = vperm.xlu0 %121, %v67
  %v123 = vpop.permute.xlu0 %122
  %124 = vset.pattern.permute.xlu0 0
  %125 = vperm.xlu0 %124, %v68
  %v126 = vpop.permute.xlu0 %125
  %127 = vset.pattern.permute.xlu0 0
  %128 = vperm.xlu0 %127, %v69
  %v129 = vpop.permute.xlu0 %128
  %130 = vset.pattern.permute.xlu0 0
  %131 = vperm.xlu0 %130, %v70
  %v132 = vpop.permute.xlu0 %131
  %133 = vset.pattern.permute.xlu0 0
  %134 = vperm.xlu0 %133, %v71
  %v135 = vpop.permute.xlu0 %134
  %136 = vset.pattern.permute.xlu0 0
  %137 = vperm.xlu0 %136, %v72
  %v138 = vpop.permute.xlu0 %137
  %139 = vset.pattern.permute.xlu0 0
  %140 = vperm.xlu0 %139, %v73
  %v141 = vpop.permute.xlu0 %140
  %142 = vset.pattern.permute.xlu0 0
  %143 = vperm.xlu0 %142, %v74
  %v144 = vpop.permute.xlu0 %143
  %145 = vset.pattern.permute.xlu0 0
  %146 = vperm.xlu0 %145, %v75
  %v147 = vpop.permute.xlu0 %146
  %148 = vset.pattern.permute.xlu0 0
  %149 = vperm.xlu0 %148, %v76
  %v150 = vpop.permute.xlu0 %149
  %151 = vset.pattern.permute.xlu0 0
  %152 = vperm.xlu0 %151, %v77
  %v153 = vpop.permute.xlu0 %152
  %154 = vset.pattern.permute.xlu0 0
  %155 = vperm.xlu0 %154, %v78
  %v156 = vpop.permute.xlu0 %155
  %157 = vset.pattern.permute.xlu0 0
  %158 = vperm.xlu0 %157, %v79
  %v159 = vpop.permute.xlu0 %158
  %160 = vset.pattern.permute.xlu0 0
  %161 = vperm.xlu0 %160, %v80
  %v162 = vpop.permute.xlu0 %161
  %163 = vset.pattern.permute.xlu0 0
  %164 = vperm.xlu0 %163, %v81
  %v165 = vpop.permute.xlu0 %164
  %166 = vset.pattern.permute.xlu0 0
  %167 = vperm.xlu0 %166, %v82
  %v168 = vpop.permute.xlu0 %167
  %169 = vset.pattern.permute.xlu0 0
  %170 = vperm.xlu0 %169, %v83
  %v171 = vpop.permute.xlu0 %170
  %172 = vset.pattern.permute.xlu0 0
  %173 = vperm.xlu0 %172, %v84
  %v174 = vpop.permute.xlu0 %173
  %175 = vset.pattern.permute.xlu0 0
  %176 = vperm.xlu0 %175, %v85
  %v177 = vpop.permute.xlu0 %176
  %178 = vset.pattern.permute.xlu0 0
  %179 = vperm.xlu0 %178, %v86
  %v180 = vpop.permute.xlu0 %179
  %181 = vset.pattern.permute.xlu0 0
  %182 = vperm.xlu0 %181, %v87
  %v183 = vpop.permute.xlu0 %182
  %184 = vset.pattern.permute.xlu0 0
  %185 = vperm.xlu0 %184, %v88
  %v186 = vpop.permute.xlu0 %185
  %vm187 = vcmp.eq.s32.totalorder %v93, %v90
  %vm188 = vcmp.eq.s32.totalorder %v96, %v90
  %vm189 = vcmp.eq.s32.totalorder %v99, %v90
  %vm190 = vcmp.eq.s32.totalorder %v102, %v90
  %vm191 = vcmp.eq.s32.totalorder %v105, %v90
  %vm192 = vcmp.eq.s32.totalorder %v108, %v90
  %vm193 = vcmp.eq.s32.totalorder %v111, %v90
  %vm194 = vcmp.eq.s32.totalorder %v114, %v90
  %vm195 = vcmp.eq.s32.totalorder %v117, %v90
  %vm196 = vcmp.eq.s32.totalorder %v120, %v90
  %vm197 = vcmp.eq.s32.totalorder %v123, %v90
  %vm198 = vcmp.eq.s32.totalorder %v126, %v90
  %vm199 = vcmp.eq.s32.totalorder %v129, %v90
  %vm200 = vcmp.eq.s32.totalorder %v132, %v90
  %vm201 = vcmp.eq.s32.totalorder %v135, %v90
  %vm202 = vcmp.eq.s32.totalorder %v138, %v90
  %vm203 = vcmp.eq.s32.totalorder %v141, %v90
  %vm204 = vcmp.eq.s32.totalorder %v144, %v90
  %vm205 = vcmp.eq.s32.totalorder %v147, %v90
  %vm206 = vcmp.eq.s32.totalorder %v150, %v90
  %vm207 = vcmp.eq.s32.totalorder %v153, %v90
  %vm208 = vcmp.eq.s32.totalorder %v156, %v90
  %vm209 = vcmp.eq.s32.totalorder %v159, %v90
  %vm210 = vcmp.eq.s32.totalorder %v162, %v90
  %vm211 = vcmp.eq.s32.totalorder %v165, %v90
  %vm212 = vcmp.eq.s32.totalorder %v168, %v90
  %vm213 = vcmp.eq.s32.totalorder %v171, %v90
  %vm214 = vcmp.eq.s32.totalorder %v174, %v90
  %vm215 = vcmp.eq.s32.totalorder %v177, %v90
  %vm216 = vcmp.eq.s32.totalorder %v180, %v90
  %vm217 = vcmp.eq.s32.totalorder %v183, %v90
  %vm218 = vcmp.eq.s32.totalorder %v186, %v90
  %v219 = vsel %vm187, 0.25, 0.0
  %v220 = vsel %vm188, 0.25, 0.0
  %v221 = vsel %vm189, 0.25, 0.0
  %v222 = vsel %vm190, 0.25, 0.0
  %v223 = vsel %vm191, 0.25, 0.0
  %v224 = vsel %vm192, 0.25, 0.0
  %v225 = vsel %vm193, 0.25, 0.0
  %v226 = vsel %vm194, 0.25, 0.0
  %v227 = vsel %vm195, 0.25, 0.0
  %v228 = vsel %vm196, 0.25, 0.0
  %v229 = vsel %vm197, 0.25, 0.0
  %v230 = vsel %vm198, 0.25, 0.0
  %v231 = vsel %vm199, 0.25, 0.0
  %v232 = vsel %vm200, 0.25, 0.0
  %v233 = vsel %vm201, 0.25, 0.0
  %v234 = vsel %vm202, 0.25, 0.0
  %v235 = vsel %vm203, 0.25, 0.0
  %v236 = vsel %vm204, 0.25, 0.0
  %v237 = vsel %vm205, 0.25, 0.0
  %v238 = vsel %vm206, 0.25, 0.0
  %v239 = vsel %vm207, 0.25, 0.0
  %v240 = vsel %vm208, 0.25, 0.0
  %v241 = vsel %vm209, 0.25, 0.0
  %v242 = vsel %vm210, 0.25, 0.0
  %v243 = vsel %vm211, 0.25, 0.0
  %v244 = vsel %vm212, 0.25, 0.0
  %v245 = vsel %vm213, 0.25, 0.0
  %v246 = vsel %vm214, 0.25, 0.0
  %v247 = vsel %vm215, 0.25, 0.0
  %v248 = vsel %vm216, 0.25, 0.0
  %v249 = vsel %vm217, 0.25, 0.0
  %v250 = vsel %vm218, 0.25, 0.0
  %v251 = vadd.f32 %v219, 0.0
  %v252 = vadd.f32 %v220, 0.0
  %v253 = vadd.f32 %v221, 0.0
  %v254 = vadd.f32 %v222, 0.0
  %v255 = vadd.f32 %v223, 0.0
  %v256 = vadd.f32 %v224, 0.0
  %v257 = vadd.f32 %v225, 0.0
  %v258 = vadd.f32 %v226, 0.0
  %v259 = vadd.f32 %v227, 0.0
  %v260 = vadd.f32 %v228, 0.0
  %v261 = vadd.f32 %v229, 0.0
  %v262 = vadd.f32 %v230, 0.0
  %v263 = vadd.f32 %v231, 0.0
  %v264 = vadd.f32 %v232, 0.0
  %v265 = vadd.f32 %v233, 0.0
  %v266 = vadd.f32 %v234, 0.0
  %v267 = vadd.f32 %v235, 0.0
  %v268 = vadd.f32 %v236, 0.0
  %v269 = vadd.f32 %v237, 0.0
  %v270 = vadd.f32 %v238, 0.0
  %v271 = vadd.f32 %v239, 0.0
  %v272 = vadd.f32 %v240, 0.0
  %v273 = vadd.f32 %v241, 0.0
  %v274 = vadd.f32 %v242, 0.0
  %v275 = vadd.f32 %v243, 0.0
  %v276 = vadd.f32 %v244, 0.0
  %v277 = vadd.f32 %v245, 0.0
  %v278 = vadd.f32 %v246, 0.0
  %v279 = vadd.f32 %v247, 0.0
  %v280 = vadd.f32 %v248, 0.0
  %v281 = vadd.f32 %v249, 0.0
  %v282 = vadd.f32 %v250, 0.0
  %283 = vset.pattern.permute.xlu0 1
  %284 = vperm.xlu0 %283, %v57
  %v285 = vpop.permute.xlu0 %284
  %286 = vset.pattern.permute.xlu0 1
  %287 = vperm.xlu0 %286, %v58
  %v288 = vpop.permute.xlu0 %287
  %289 = vset.pattern.permute.xlu0 1
  %290 = vperm.xlu0 %289, %v59
  %v291 = vpop.permute.xlu0 %290
  %292 = vset.pattern.permute.xlu0 1
  %293 = vperm.xlu0 %292, %v60
  %v294 = vpop.permute.xlu0 %293
  %295 = vset.pattern.permute.xlu0 1
  %296 = vperm.xlu0 %295, %v61
  %v297 = vpop.permute.xlu0 %296
  %298 = vset.pattern.permute.xlu0 1
  %299 = vperm.xlu0 %298, %v62
  %v300 = vpop.permute.xlu0 %299
  %301 = vset.pattern.permute.xlu0 1
  %302 = vperm.xlu0 %301, %v63
  %v303 = vpop.permute.xlu0 %302
  %304 = vset.pattern.permute.xlu0 1
  %305 = vperm.xlu0 %304, %v64
  %v306 = vpop.permute.xlu0 %305
  %307 = vset.pattern.permute.xlu0 1
  %308 = vperm.xlu0 %307, %v65
  %v309 = vpop.permute.xlu0 %308
  %310 = vset.pattern.permute.xlu0 1
  %311 = vperm.xlu0 %310, %v66
  %v312 = vpop.permute.xlu0 %311
  %313 = vset.pattern.permute.xlu0 1
  %314 = vperm.xlu0 %313, %v67
  %v315 = vpop.permute.xlu0 %314
  %316 = vset.pattern.permute.xlu0 1
  %317 = vperm.xlu0 %316, %v68
  %v318 = vpop.permute.xlu0 %317
  %319 = vset.pattern.permute.xlu0 1
  %320 = vperm.xlu0 %319, %v69
  %v321 = vpop.permute.xlu0 %320
  %322 = vset.pattern.permute.xlu0 1
  %323 = vperm.xlu0 %322, %v70
  %v324 = vpop.permute.xlu0 %323
  %325 = vset.pattern.permute.xlu0 1
  %326 = vperm.xlu0 %325, %v71
  %v327 = vpop.permute.xlu0 %326
  %328 = vset.pattern.permute.xlu0 1
  %329 = vperm.xlu0 %328, %v72
  %v330 = vpop.permute.xlu0 %329
  %331 = vset.pattern.permute.xlu0 1
  %332 = vperm.xlu0 %331, %v73
  %v333 = vpop.permute.xlu0 %332
  %334 = vset.pattern.permute.xlu0 1
  %335 = vperm.xlu0 %334, %v74
  %v336 = vpop.permute.xlu0 %335
  %337 = vset.pattern.permute.xlu0 1
  %338 = vperm.xlu0 %337, %v75
  %v339 = vpop.permute.xlu0 %338
  %340 = vset.pattern.permute.xlu0 1
  %341 = vperm.xlu0 %340, %v76
  %v342 = vpop.permute.xlu0 %341
  %343 = vset.pattern.permute.xlu0 1
  %344 = vperm.xlu0 %343, %v77
  %v345 = vpop.permute.xlu0 %344
  %346 = vset.pattern.permute.xlu0 1
  %347 = vperm.xlu0 %346, %v78
  %v348 = vpop.permute.xlu0 %347
  %349 = vset.pattern.permute.xlu0 1
  %350 = vperm.xlu0 %349, %v79
  %v351 = vpop.permute.xlu0 %350
  %352 = vset.pattern.permute.xlu0 1
  %353 = vperm.xlu0 %352, %v80
  %v354 = vpop.permute.xlu0 %353
  %355 = vset.pattern.permute.xlu0 1
  %356 = vperm.xlu0 %355, %v81
  %v357 = vpop.permute.xlu0 %356
  %358 = vset.pattern.permute.xlu0 1
  %359 = vperm.xlu0 %358, %v82
  %v360 = vpop.permute.xlu0 %359
  %361 = vset.pattern.permute.xlu0 1
  %362 = vperm.xlu0 %361, %v83
  %v363 = vpop.permute.xlu0 %362
  %364 = vset.pattern.permute.xlu0 1
  %365 = vperm.xlu0 %364, %v84
  %v366 = vpop.permute.xlu0 %365
  %367 = vset.pattern.permute.xlu0 1
  %368 = vperm.xlu0 %367, %v85
  %v369 = vpop.permute.xlu0 %368
  %370 = vset.pattern.permute.xlu0 1
  %371 = vperm.xlu0 %370, %v86
  %v372 = vpop.permute.xlu0 %371
  %373 = vset.pattern.permute.xlu0 1
  %374 = vperm.xlu0 %373, %v87
  %v375 = vpop.permute.xlu0 %374
  %376 = vset.pattern.permute.xlu0 1
  %377 = vperm.xlu0 %376, %v88
  %v378 = vpop.permute.xlu0 %377
  %vm379 = vcmp.eq.s32.totalorder %v285, %v90
  %vm380 = vcmp.eq.s32.totalorder %v288, %v90
  %vm381 = vcmp.eq.s32.totalorder %v291, %v90
  %vm382 = vcmp.eq.s32.totalorder %v294, %v90
  %vm383 = vcmp.eq.s32.totalorder %v297, %v90
  %vm384 = vcmp.eq.s32.totalorder %v300, %v90
  %vm385 = vcmp.eq.s32.totalorder %v303, %v90
  %vm386 = vcmp.eq.s32.totalorder %v306, %v90
  %vm387 = vcmp.eq.s32.totalorder %v309, %v90
  %vm388 = vcmp.eq.s32.totalorder %v312, %v90
  %vm389 = vcmp.eq.s32.totalorder %v315, %v90
  %vm390 = vcmp.eq.s32.totalorder %v318, %v90
  %vm391 = vcmp.eq.s32.totalorder %v321, %v90
  %vm392 = vcmp.eq.s32.totalorder %v324, %v90
  %vm393 = vcmp.eq.s32.totalorder %v327, %v90
  %vm394 = vcmp.eq.s32.totalorder %v330, %v90
  %vm395 = vcmp.eq.s32.totalorder %v333, %v90
  %vm396 = vcmp.eq.s32.totalorder %v336, %v90
  %vm397 = vcmp.eq.s32.totalorder %v339, %v90
  %vm398 = vcmp.eq.s32.totalorder %v342, %v90
  %vm399 = vcmp.eq.s32.totalorder %v345, %v90
  %vm400 = vcmp.eq.s32.totalorder %v348, %v90
  %vm401 = vcmp.eq.s32.totalorder %v351, %v90
  %vm402 = vcmp.eq.s32.totalorder %v354, %v90
  %vm403 = vcmp.eq.s32.totalorder %v357, %v90
  %vm404 = vcmp.eq.s32.totalorder %v360, %v90
  %vm405 = vcmp.eq.s32.totalorder %v363, %v90
  %vm406 = vcmp.eq.s32.totalorder %v366, %v90
  %vm407 = vcmp.eq.s32.totalorder %v369, %v90
  %vm408 = vcmp.eq.s32.totalorder %v372, %v90
  %vm409 = vcmp.eq.s32.totalorder %v375, %v90
  %vm410 = vcmp.eq.s32.totalorder %v378, %v90
  %v411 = vsel %vm379, 0.25, 0.0
  %v412 = vsel %vm380, 0.25, 0.0
  %v413 = vsel %vm381, 0.25, 0.0
  %v414 = vsel %vm382, 0.25, 0.0
  %v415 = vsel %vm383, 0.25, 0.0
  %v416 = vsel %vm384, 0.25, 0.0
  %v417 = vsel %vm385, 0.25, 0.0
  %v418 = vsel %vm386, 0.25, 0.0
  %v419 = vsel %vm387, 0.25, 0.0
  %v420 = vsel %vm388, 0.25, 0.0
  %v421 = vsel %vm389, 0.25, 0.0
  %v422 = vsel %vm390, 0.25, 0.0
  %v423 = vsel %vm391, 0.25, 0.0
  %v424 = vsel %vm392, 0.25, 0.0
  %v425 = vsel %vm393, 0.25, 0.0
  %v426 = vsel %vm394, 0.25, 0.0
  %v427 = vsel %vm395, 0.25, 0.0
  %v428 = vsel %vm396, 0.25, 0.0
  %v429 = vsel %vm397, 0.25, 0.0
  %v430 = vsel %vm398, 0.25, 0.0
  %v431 = vsel %vm399, 0.25, 0.0
  %v432 = vsel %vm400, 0.25, 0.0
  %v433 = vsel %vm401, 0.25, 0.0
  %v434 = vsel %vm402, 0.25, 0.0
  %v435 = vsel %vm403, 0.25, 0.0
  %v436 = vsel %vm404, 0.25, 0.0
  %v437 = vsel %vm405, 0.25, 0.0
  %v438 = vsel %vm406, 0.25, 0.0
  %v439 = vsel %vm407, 0.25, 0.0
  %v440 = vsel %vm408, 0.25, 0.0
  %v441 = vsel %vm409, 0.25, 0.0
  %v442 = vsel %vm410, 0.25, 0.0
  %v443 = vadd.f32 %v251, %v411
  %v444 = vadd.f32 %v252, %v412
  %v445 = vadd.f32 %v253, %v413
  %v446 = vadd.f32 %v254, %v414
  %v447 = vadd.f32 %v255, %v415
  %v448 = vadd.f32 %v256, %v416
  %v449 = vadd.f32 %v257, %v417
  %v450 = vadd.f32 %v258, %v418
  %v451 = vadd.f32 %v259, %v419
  %v452 = vadd.f32 %v260, %v420
  %v453 = vadd.f32 %v261, %v421
  %v454 = vadd.f32 %v262, %v422
  %v455 = vadd.f32 %v263, %v423
  %v456 = vadd.f32 %v264, %v424
  %v457 = vadd.f32 %v265, %v425
  %v458 = vadd.f32 %v266, %v426
  %v459 = vadd.f32 %v267, %v427
  %v460 = vadd.f32 %v268, %v428
  %v461 = vadd.f32 %v269, %v429
  %v462 = vadd.f32 %v270, %v430
  %v463 = vadd.f32 %v271, %v431
  %v464 = vadd.f32 %v272, %v432
  %v465 = vadd.f32 %v273, %v433
  %v466 = vadd.f32 %v274, %v434
  %v467 = vadd.f32 %v275, %v435
  %v468 = vadd.f32 %v276, %v436
  %v469 = vadd.f32 %v277, %v437
  %v470 = vadd.f32 %v278, %v438
  %v471 = vadd.f32 %v279, %v439
  %v472 = vadd.f32 %v280, %v440
  %v473 = vadd.f32 %v281, %v441
  %v474 = vadd.f32 %v282, %v442
  %v475 = vld [vmem:[%s2] sm:$0xff]
  %vm476 = vcmask 64512
  %v478 = vsel %vm476, %v443, 0
  %v481 = vsel %vm476, %v444, 0
  %v484 = vsel %vm476, %v445, 0
  %v487 = vsel %vm476, %v446, 0
  %v490 = vsel %vm476, %v447, 0
  %v493 = vsel %vm476, %v448, 0
  %v496 = vsel %vm476, %v449, 0
  %v499 = vsel %vm476, %v450, 0
  %v502 = vsel %vm476, %v451, 0
  %v505 = vsel %vm476, %v452, 0
  %v508 = vsel %vm476, %v453, 0
  %v511 = vsel %vm476, %v454, 0
  %v514 = vsel %vm476, %v455, 0
  %v517 = vsel %vm476, %v456, 0
  %v520 = vsel %vm476, %v457, 0
  %v523 = vsel %vm476, %v458, 0
  %v526 = vsel %vm476, %v459, 0
  %v529 = vsel %vm476, %v460, 0
  %v532 = vsel %vm476, %v461, 0
  %v535 = vsel %vm476, %v462, 0
  %v538 = vsel %vm476, %v463, 0
  %v541 = vsel %vm476, %v464, 0
  %v544 = vsel %vm476, %v465, 0
  %v547 = vsel %vm476, %v466, 0
  %v550 = vsel %vm476, %v467, 0
  %v553 = vsel %vm476, %v468, 0
  %v556 = vsel %vm476, %v469, 0
  %v559 = vsel %vm476, %v470, 0
  %v562 = vsel %vm476, %v471, 0
  %v565 = vsel %vm476, %v472, 0
  %v568 = vsel %vm476, %v473, 0
  %v571 = vsel %vm476, %v474, 0
  %573 = vmatprep.subr.mxu0 0.0
  %574 = vmatpush1.msra.mxu0 0.0
  %575 = vmatprep.subr.mxu0 0.0
  %576 = vmatpush1.msra.mxu0 0.0
  %577 = vmatprep.subr.mxu0 0.0
  %578 = vmatpush1.msra.mxu0 0.0
  %579 = vmatprep.subr.mxu0 0.0
  %580 = vmatpush1.msra.mxu0 0.0
  %581 = vmatprep.subr.mxu0 0.0
  %582 = vmatpush1.msra.mxu0 0.0
  %583 = vmatprep.subr.mxu0 0.0
  %584 = vmatpush1.msra.mxu0 0.0
  %585 = vmatprep.subr.mxu0 0.0
  %586 = vmatpush1.msra.mxu0 0.0
  %587 = vmatprep.subr.mxu0 0.0
  %588 = vmatpush1.msra.mxu0 0.0
  %589 = vmatprep.subr.mxu0 0.0
  %590 = vmatpush1.msra.mxu0 0.0
  %591 = vmatprep.subr.mxu0 0.0
  %592 = vmatpush1.msra.mxu0 0.0
  %593 = vmatprep.subr.mxu0 0.0
  %594 = vmatpush1.msra.mxu0 0.0
  %595 = vmatprep.subr.mxu0 0.0
  %596 = vmatpush1.msra.mxu0 0.0
  %597 = vmatprep.subr.mxu0 0.0
  %598 = vmatpush1.msra.mxu0 0.0
  %599 = vmatprep.subr.mxu0 0.0
  %600 = vmatpush1.msra.mxu0 0.0
  %601 = vmatprep.subr.mxu0 0.0
  %602 = vmatpush1.msra.mxu0 0.0
  %603 = vmatprep.subr.mxu0 0.0
  %604 = vmatpush1.msra.mxu0 %v475
  %605 = vmatprep.subr.mxu0 0.0
  %606 = vmatpush2.msra.mxu0 0.0
  %607 = vmatprep.subr.mxu0 0.0
  %608 = vmatpush2.msra.mxu0 0.0
  %609 = vmatprep.subr.mxu0 0.0
  %610 = vmatpush2.msra.mxu0 0.0
  %611 = vmatprep.subr.mxu0 0.0
  %612 = vmatpush2.msra.mxu0 0.0
  %613 = vmatprep.subr.mxu0 0.0
  %614 = vmatpush2.msra.mxu0 0.0
  %615 = vmatprep.subr.mxu0 0.0
  %616 = vmatpush2.msra.mxu0 0.0
  %617 = vmatprep.subr.mxu0 0.0
  %618 = vmatpush2.msra.mxu0 0.0
  %619 = vmatprep.subr.mxu0 0.0
  %620 = vmatpush2.msra.mxu0 0.0
  %621 = vmatprep.subr.mxu0 0.0
  %622 = vmatpush2.msra.mxu0 0.0
  %623 = vmatprep.subr.mxu0 0.0
  %624 = vmatpush2.msra.mxu0 0.0
  %625 = vmatprep.subr.mxu0 0.0
  %626 = vmatpush2.msra.mxu0 0.0
  %627 = vmatprep.subr.mxu0 0.0
  %628 = vmatpush2.msra.mxu0 0.0
  %629 = vmatprep.subr.mxu0 0.0
  %630 = vmatpush2.msra.mxu0 0.0
  %631 = vmatprep.subr.mxu0 0.0
  %632 = vmatpush2.msra.mxu0 0.0
  %633 = vmatprep.subr.mxu0 0.0
  %634 = vmatpush2.msra.mxu0 0.0
  %635 = vmatprep.subr.mxu0 0.0
  %636 = vmatpush2.msra.mxu0 0.0
  %637 = vmatprep.mubr.f32.mxu0 0.0
  %638 = vmatmul.mubr.f32.gmra.mxu0 %v478
  %v639 = vpop.f32.mrf.mxu0
  %v640 = vadd.f32 0.0, %v639
  %v641 = vpop.f32.mrf.mxu0
  %642 = vmatprep.mubr.f32.mxu0 0.0
  %643 = vmatmul.mubr.f32.gmra.mxu0 %v481
  %v644 = vpop.f32.mrf.mxu0
  %v645 = vadd.f32 0.0, %v644
  %v646 = vpop.f32.mrf.mxu0
  %647 = vmatprep.mubr.f32.mxu0 0.0
  %648 = vmatmul.mubr.f32.gmra.mxu0 %v484
  %v649 = vpop.f32.mrf.mxu0
  %v650 = vadd.f32 0.0, %v649
  %v651 = vpop.f32.mrf.mxu0
  %652 = vmatprep.mubr.f32.mxu0 0.0
  %653 = vmatmul.mubr.f32.gmra.mxu0 %v487
  %v654 = vpop.f32.mrf.mxu0
  %v655 = vadd.f32 0.0, %v654
  %v656 = vpop.f32.mrf.mxu0
  %657 = vmatprep.mubr.f32.mxu0 0.0
  %658 = vmatmul.mubr.f32.gmra.mxu0 %v490
  %v659 = vpop.f32.mrf.mxu0
  %v660 = vadd.f32 0.0, %v659
  %v661 = vpop.f32.mrf.mxu0
  %662 = vmatprep.mubr.f32.mxu0 0.0
  %663 = vmatmul.mubr.f32.gmra.mxu0 %v493
  %v664 = vpop.f32.mrf.mxu0
  %v665 = vadd.f32 0.0, %v664
  %v666 = vpop.f32.mrf.mxu0
  %667 = vmatprep.mubr.f32.mxu0 0.0
  %668 = vmatmul.mubr.f32.gmra.mxu0 %v496
  %v669 = vpop.f32.mrf.mxu0
  %v670 = vadd.f32 0.0, %v669
  %v671 = vpop.f32.mrf.mxu0
  %672 = vmatprep.mubr.f32.mxu0 0.0
  %673 = vmatmul.mubr.f32.gmra.mxu0 %v499
  %v674 = vpop.f32.mrf.mxu0
  %v675 = vadd.f32 0.0, %v674
  %v676 = vpop.f32.mrf.mxu0
  %677 = vmatprep.mubr.f32.mxu0 0.0
  %678 = vmatmul.mubr.f32.gmra.mxu0 %v502
  %v679 = vpop.f32.mrf.mxu0
  %v680 = vadd.f32 0.0, %v679
  %v681 = vpop.f32.mrf.mxu0
  %682 = vmatprep.mubr.f32.mxu0 0.0
  %683 = vmatmul.mubr.f32.gmra.mxu0 %v505
  %v684 = vpop.f32.mrf.mxu0
  %v685 = vadd.f32 0.0, %v684
  %v686 = vpop.f32.mrf.mxu0
  %687 = vmatprep.mubr.f32.mxu0 0.0
  %688 = vmatmul.mubr.f32.gmra.mxu0 %v508
  %v689 = vpop.f32.mrf.mxu0
  %v690 = vadd.f32 0.0, %v689
  %v691 = vpop.f32.mrf.mxu0
  %692 = vmatprep.mubr.f32.mxu0 0.0
  %693 = vmatmul.mubr.f32.gmra.mxu0 %v511
  %v694 = vpop.f32.mrf.mxu0
  %v695 = vadd.f32 0.0, %v694
  %v696 = vpop.f32.mrf.mxu0
  %697 = vmatprep.mubr.f32.mxu0 0.0
  %698 = vmatmul.mubr.f32.gmra.mxu0 %v514
  %v699 = vpop.f32.mrf.mxu0
  %v700 = vadd.f32 0.0, %v699
  %v701 = vpop.f32.mrf.mxu0
  %702 = vmatprep.mubr.f32.mxu0 0.0
  %703 = vmatmul.mubr.f32.gmra.mxu0 %v517
  %v704 = vpop.f32.mrf.mxu0
  %v705 = vadd.f32 0.0, %v704
  %v706 = vpop.f32.mrf.mxu0
  %707 = vmatprep.mubr.f32.mxu0 0.0
  %708 = vmatmul.mubr.f32.gmra.mxu0 %v520
  %v709 = vpop.f32.mrf.mxu0
  %v710 = vadd.f32 0.0, %v709
  %v711 = vpop.f32.mrf.mxu0
  %712 = vmatprep.mubr.f32.mxu0 0.0
  %713 = vmatmul.mubr.f32.gmra.mxu0 %v523
  %v714 = vpop.f32.mrf.mxu0
  %v715 = vadd.f32 0.0, %v714
  %v716 = vpop.f32.mrf.mxu0
  %717 = vmatprep.mubr.f32.mxu0 0.0
  %718 = vmatmul.mubr.f32.gmra.mxu0 %v526
  %v719 = vpop.f32.mrf.mxu0
  %v720 = vadd.f32 0.0, %v719
  %v721 = vpop.f32.mrf.mxu0
  %722 = vmatprep.mubr.f32.mxu0 0.0
  %723 = vmatmul.mubr.f32.gmra.mxu0 %v529
  %v724 = vpop.f32.mrf.mxu0
  %v725 = vadd.f32 0.0, %v724
  %v726 = vpop.f32.mrf.mxu0
  %727 = vmatprep.mubr.f32.mxu0 0.0
  %728 = vmatmul.mubr.f32.gmra.mxu0 %v532
  %v729 = vpop.f32.mrf.mxu0
  %v730 = vadd.f32 0.0, %v729
  %v731 = vpop.f32.mrf.mxu0
  %732 = vmatprep.mubr.f32.mxu0 0.0
  %733 = vmatmul.mubr.f32.gmra.mxu0 %v535
  %v734 = vpop.f32.mrf.mxu0
  %v735 = vadd.f32 0.0, %v734
  %v736 = vpop.f32.mrf.mxu0
  %737 = vmatprep.mubr.f32.mxu0 0.0
  %738 = vmatmul.mubr.f32.gmra.mxu0 %v538
  %v739 = vpop.f32.mrf.mxu0
  %v740 = vadd.f32 0.0, %v739
  %v741 = vpop.f32.mrf.mxu0
  %742 = vmatprep.mubr.f32.mxu0 0.0
  %743 = vmatmul.mubr.f32.gmra.mxu0 %v541
  %v744 = vpop.f32.mrf.mxu0
  %v745 = vadd.f32 0.0, %v744
  %v746 = vpop.f32.mrf.mxu0
  %747 = vmatprep.mubr.f32.mxu0 0.0
  %748 = vmatmul.mubr.f32.gmra.mxu0 %v544
  %v749 = vpop.f32.mrf.mxu0
  %v750 = vadd.f32 0.0, %v749
  %v751 = vpop.f32.mrf.mxu0
  %752 = vmatprep.mubr.f32.mxu0 0.0
  %753 = vmatmul.mubr.f32.gmra.mxu0 %v547
  %v754 = vpop.f32.mrf.mxu0
  %v755 = vadd.f32 0.0, %v754
  %v756 = vpop.f32.mrf.mxu0
  %757 = vmatprep.mubr.f32.mxu0 0.0
  %758 = vmatmul.mubr.f32.gmra.mxu0 %v550
  %v759 = vpop.f32.mrf.mxu0
  %v760 = vadd.f32 0.0, %v759
  %v761 = vpop.f32.mrf.mxu0
  %762 = vmatprep.mubr.f32.mxu0 0.0
  %763 = vmatmul.mubr.f32.gmra.mxu0 %v553
  %v764 = vpop.f32.mrf.mxu0
  %v765 = vadd.f32 0.0, %v764
  %v766 = vpop.f32.mrf.mxu0
  %767 = vmatprep.mubr.f32.mxu0 0.0
  %768 = vmatmul.mubr.f32.gmra.mxu0 %v556
  %v769 = vpop.f32.mrf.mxu0
  %v770 = vadd.f32 0.0, %v769
  %v771 = vpop.f32.mrf.mxu0
  %772 = vmatprep.mubr.f32.mxu0 0.0
  %773 = vmatmul.mubr.f32.gmra.mxu0 %v559
  %v774 = vpop.f32.mrf.mxu0
  %v775 = vadd.f32 0.0, %v774
  %v776 = vpop.f32.mrf.mxu0
  %777 = vmatprep.mubr.f32.mxu0 0.0
  %778 = vmatmul.mubr.f32.gmra.mxu0 %v562
  %v779 = vpop.f32.mrf.mxu0
  %v780 = vadd.f32 0.0, %v779
  %v781 = vpop.f32.mrf.mxu0
  %782 = vmatprep.mubr.f32.mxu0 0.0
  %783 = vmatmul.mubr.f32.gmra.mxu0 %v565
  %v784 = vpop.f32.mrf.mxu0
  %v785 = vadd.f32 0.0, %v784
  %v786 = vpop.f32.mrf.mxu0
  %787 = vmatprep.mubr.f32.mxu0 0.0
  %788 = vmatmul.mubr.f32.gmra.mxu0 %v568
  %v789 = vpop.f32.mrf.mxu0
  %v790 = vadd.f32 0.0, %v789
  %v791 = vpop.f32.mrf.mxu0
  %792 = vmatprep.mubr.f32.mxu0 0.0
  %793 = vmatmul.mubr.f32.gmra.mxu0 %v571
  %v794 = vpop.f32.mrf.mxu0
  %v795 = vadd.f32 0.0, %v794
  %v796 = vpop.f32.mrf.mxu0
  %797 = vdwg.mxu0
  %v798 = vld [vmem:[%s0] sm:$0xff]
  %v799 = vld [vmem:[%s0 + $0x8] sm:$0xff]
  %v800 = vld [vmem:[%s0 + $0x10] sm:$0xff]
  %v801 = vld [vmem:[%s0 + $0x18] sm:$0xff]
  %v802 = vld [vmem:[%s0 + $0x20] sm:$0xff]
  %v803 = vld [vmem:[%s0 + $0x28] sm:$0xff]
  %v804 = vld [vmem:[%s0 + $0x30] sm:$0xff]
  %v805 = vld [vmem:[%s0 + $0x38] sm:$0xff]
  %v806 = vld [vmem:[%s0 + $0x40] sm:$0xff]
  %v807 = vld [vmem:[%s0 + $0x48] sm:$0xff]
  %v808 = vld [vmem:[%s0 + $0x50] sm:$0xff]
  %v809 = vld [vmem:[%s0 + $0x58] sm:$0xff]
  %v810 = vld [vmem:[%s0 + $0x60] sm:$0xff]
  %v811 = vld [vmem:[%s0 + $0x68] sm:$0xff]
  %v812 = vld [vmem:[%s0 + $0x70] sm:$0xff]
  %v813 = vld [vmem:[%s0 + $0x78] sm:$0xff]
  %v814 = vld [vmem:[%s0 + $0x80] sm:$0xff]
  %v815 = vld [vmem:[%s0 + $0x88] sm:$0xff]
  %v816 = vld [vmem:[%s0 + $0x90] sm:$0xff]
  %v817 = vld [vmem:[%s0 + $0x98] sm:$0xff]
  %v818 = vld [vmem:[%s0 + $0xa0] sm:$0xff]
  %v819 = vld [vmem:[%s0 + $0xa8] sm:$0xff]
  %v820 = vld [vmem:[%s0 + $0xb0] sm:$0xff]
  %v821 = vld [vmem:[%s0 + $0xb8] sm:$0xff]
  %v822 = vld [vmem:[%s0 + $0xc0] sm:$0xff]
  %v823 = vld [vmem:[%s0 + $0xc8] sm:$0xff]
  %v824 = vld [vmem:[%s0 + $0xd0] sm:$0xff]
  %v825 = vld [vmem:[%s0 + $0xd8] sm:$0xff]
  %v826 = vld [vmem:[%s0 + $0xe0] sm:$0xff]
  %v827 = vld [vmem:[%s0 + $0xe8] sm:$0xff]
  %v828 = vld [vmem:[%s0 + $0xf0] sm:$0xff]
  %v829 = vld [vmem:[%s0 + $0xf8] sm:$0xff]
  %v830 = vadd.f32 %v798, %v640
  %v831 = vadd.f32 %v799, %v645
  %v832 = vadd.f32 %v800, %v650
  %v833 = vadd.f32 %v801, %v655
  %v834 = vadd.f32 %v802, %v660
  %v835 = vadd.f32 %v803, %v665
  %v836 = vadd.f32 %v804, %v670
  %v837 = vadd.f32 %v805, %v675
  %v838 = vadd.f32 %v806, %v680
  %v839 = vadd.f32 %v807, %v685
  %v840 = vadd.f32 %v808, %v690
  %v841 = vadd.f32 %v809, %v695
  %v842 = vadd.f32 %v810, %v700
  %v843 = vadd.f32 %v811, %v705
  %v844 = vadd.f32 %v812, %v710
  %v845 = vadd.f32 %v813, %v715
  %v846 = vadd.f32 %v814, %v720
  %v847 = vadd.f32 %v815, %v725
  %v848 = vadd.f32 %v816, %v730
  %v849 = vadd.f32 %v817, %v735
  %v850 = vadd.f32 %v818, %v740
  %v851 = vadd.f32 %v819, %v745
  %v852 = vadd.f32 %v820, %v750
  %v853 = vadd.f32 %v821, %v755
  %v854 = vadd.f32 %v822, %v760
  %v855 = vadd.f32 %v823, %v765
  %v856 = vadd.f32 %v824, %v770
  %v857 = vadd.f32 %v825, %v775
  %v858 = vadd.f32 %v826, %v780
  %v859 = vadd.f32 %v827, %v785
  %v860 = vadd.f32 %v828, %v790
  %v861 = vadd.f32 %v829, %v795
  %v862 = vld [vmem:[%s4] sm:$0xff]
  %v864 = vsel %vm476, %v830, 0
  %v867 = vsel %vm476, %v831, 0
  %v870 = vsel %vm476, %v832, 0
  %v873 = vsel %vm476, %v833, 0
  %v876 = vsel %vm476, %v834, 0
  %v879 = vsel %vm476, %v835, 0
  %v882 = vsel %vm476, %v836, 0
  %v885 = vsel %vm476, %v837, 0
  %v888 = vsel %vm476, %v838, 0
  %v891 = vsel %vm476, %v839, 0
  %v894 = vsel %vm476, %v840, 0
  %v897 = vsel %vm476, %v841, 0
  %v900 = vsel %vm476, %v842, 0
  %v903 = vsel %vm476, %v843, 0
  %v906 = vsel %vm476, %v844, 0
  %v909 = vsel %vm476, %v845, 0
  %v912 = vsel %vm476, %v846, 0
  %v915 = vsel %vm476, %v847, 0
  %v918 = vsel %vm476, %v848, 0
  %v921 = vsel %vm476, %v849, 0
  %v924 = vsel %vm476, %v850, 0
  %v927 = vsel %vm476, %v851, 0
  %v930 = vsel %vm476, %v852, 0
  %v933 = vsel %vm476, %v853, 0
  %v936 = vsel %vm476, %v854, 0
  %v939 = vsel %vm476, %v855, 0
  %v942 = vsel %vm476, %v856, 0
  %v945 = vsel %vm476, %v857, 0
  %v948 = vsel %vm476, %v858, 0
  %v951 = vsel %vm476, %v859, 0
  %v954 = vsel %vm476, %v860, 0
  %v957 = vsel %vm476, %v861, 0
  %959 = vmatprep.subr.mxu0 0.0
  %960 = vmatpush1.msra.mxu0 0.0
  %961 = vmatprep.subr.mxu0 0.0
  %962 = vmatpush1.msra.mxu0 0.0
  %963 = vmatprep.subr.mxu0 0.0
  %964 = vmatpush1.msra.mxu0 0.0
  %965 = vmatprep.subr.mxu0 0.0
  %966 = vmatpush1.msra.mxu0 0.0
  %967 = vmatprep.subr.mxu0 0.0
  %968 = vmatpush1.msra.mxu0 0.0
  %969 = vmatprep.subr.mxu0 0.0
  %970 = vmatpush1.msra.mxu0 0.0
  %971 = vmatprep.subr.mxu0 0.0
  %972 = vmatpush1.msra.mxu0 0.0
  %973 = vmatprep.subr.mxu0 0.0
  %974 = vmatpush1.msra.mxu0 0.0
  %975 = vmatprep.subr.mxu0 0.0
  %976 = vmatpush1.msra.mxu0 0.0
  %977 = vmatprep.subr.mxu0 0.0
  %978 = vmatpush1.msra.mxu0 0.0
  %979 = vmatprep.subr.mxu0 0.0
  %980 = vmatpush1.msra.mxu0 0.0
  %981 = vmatprep.subr.mxu0 0.0
  %982 = vmatpush1.msra.mxu0 0.0
  %983 = vmatprep.subr.mxu0 0.0
  %984 = vmatpush1.msra.mxu0 0.0
  %985 = vmatprep.subr.mxu0 0.0
  %986 = vmatpush1.msra.mxu0 0.0
  %987 = vmatprep.subr.mxu0 0.0
  %988 = vmatpush1.msra.mxu0 0.0
  %989 = vmatprep.subr.mxu0 0.0
  %990 = vmatpush1.msra.mxu0 %v862
  %991 = vmatprep.subr.mxu0 0.0
  %992 = vmatpush2.msra.mxu0 0.0
  %993 = vmatprep.subr.mxu0 0.0
  %994 = vmatpush2.msra.mxu0 0.0
  %995 = vmatprep.subr.mxu0 0.0
  %996 = vmatpush2.msra.mxu0 0.0
  %997 = vmatprep.subr.mxu0 0.0
  %998 = vmatpush2.msra.mxu0 0.0
  %999 = vmatprep.subr.mxu0 0.0
  %1000 = vmatpush2.msra.mxu0 0.0
  %1001 = vmatprep.subr.mxu0 0.0
  %1002 = vmatpush2.msra.mxu0 0.0
  %1003 = vmatprep.subr.mxu0 0.0
  %1004 = vmatpush2.msra.mxu0 0.0
  %1005 = vmatprep.subr.mxu0 0.0
  %1006 = vmatpush2.msra.mxu0 0.0
  %1007 = vmatprep.subr.mxu0 0.0
  %1008 = vmatpush2.msra.mxu0 0.0
  %1009 = vmatprep.subr.mxu0 0.0
  %1010 = vmatpush2.msra.mxu0 0.0
  %1011 = vmatprep.subr.mxu0 0.0
  %1012 = vmatpush2.msra.mxu0 0.0
  %1013 = vmatprep.subr.mxu0 0.0
  %1014 = vmatpush2.msra.mxu0 0.0
  %1015 = vmatprep.subr.mxu0 0.0
  %1016 = vmatpush2.msra.mxu0 0.0
  %1017 = vmatprep.subr.mxu0 0.0
  %1018 = vmatpush2.msra.mxu0 0.0
  %1019 = vmatprep.subr.mxu0 0.0
  %1020 = vmatpush2.msra.mxu0 0.0
  %1021 = vmatprep.subr.mxu0 0.0
  %1022 = vmatpush2.msra.mxu0 0.0
  %1023 = vmatprep.mubr.f32.mxu0 0.0
  %1024 = vmatmul.mubr.f32.gmra.mxu0 %v864
  %v1025 = vpop.f32.mrf.mxu0
  %v1026 = vadd.f32 0.0, %v1025
  %v1027 = vpop.f32.mrf.mxu0
  %1028 = vmatprep.mubr.f32.mxu0 0.0
  %1029 = vmatmul.mubr.f32.gmra.mxu0 %v867
  %v1030 = vpop.f32.mrf.mxu0
  %v1031 = vadd.f32 0.0, %v1030
  %v1032 = vpop.f32.mrf.mxu0
  %1033 = vmatprep.mubr.f32.mxu0 0.0
  %1034 = vmatmul.mubr.f32.gmra.mxu0 %v870
  %v1035 = vpop.f32.mrf.mxu0
  %v1036 = vadd.f32 0.0, %v1035
  %v1037 = vpop.f32.mrf.mxu0
  %1038 = vmatprep.mubr.f32.mxu0 0.0
  %1039 = vmatmul.mubr.f32.gmra.mxu0 %v873
  %v1040 = vpop.f32.mrf.mxu0
  %v1041 = vadd.f32 0.0, %v1040
  %v1042 = vpop.f32.mrf.mxu0
  %1043 = vmatprep.mubr.f32.mxu0 0.0
  %1044 = vmatmul.mubr.f32.gmra.mxu0 %v876
  %v1045 = vpop.f32.mrf.mxu0
  %v1046 = vadd.f32 0.0, %v1045
  %v1047 = vpop.f32.mrf.mxu0
  %1048 = vmatprep.mubr.f32.mxu0 0.0
  %1049 = vmatmul.mubr.f32.gmra.mxu0 %v879
  %v1050 = vpop.f32.mrf.mxu0
  %v1051 = vadd.f32 0.0, %v1050
  %v1052 = vpop.f32.mrf.mxu0
  %1053 = vmatprep.mubr.f32.mxu0 0.0
  %1054 = vmatmul.mubr.f32.gmra.mxu0 %v882
  %v1055 = vpop.f32.mrf.mxu0
  %v1056 = vadd.f32 0.0, %v1055
  %v1057 = vpop.f32.mrf.mxu0
  %1058 = vmatprep.mubr.f32.mxu0 0.0
  %1059 = vmatmul.mubr.f32.gmra.mxu0 %v885
  %v1060 = vpop.f32.mrf.mxu0
  %v1061 = vadd.f32 0.0, %v1060
  %v1062 = vpop.f32.mrf.mxu0
  %1063 = vmatprep.mubr.f32.mxu0 0.0
  %1064 = vmatmul.mubr.f32.gmra.mxu0 %v888
  %v1065 = vpop.f32.mrf.mxu0
  %v1066 = vadd.f32 0.0, %v1065
  %v1067 = vpop.f32.mrf.mxu0
  %1068 = vmatprep.mubr.f32.mxu0 0.0
  %1069 = vmatmul.mubr.f32.gmra.mxu0 %v891
  %v1070 = vpop.f32.mrf.mxu0
  %v1071 = vadd.f32 0.0, %v1070
  %v1072 = vpop.f32.mrf.mxu0
  %1073 = vmatprep.mubr.f32.mxu0 0.0
  %1074 = vmatmul.mubr.f32.gmra.mxu0 %v894
  %v1075 = vpop.f32.mrf.mxu0
  %v1076 = vadd.f32 0.0, %v1075
  %v1077 = vpop.f32.mrf.mxu0
  %1078 = vmatprep.mubr.f32.mxu0 0.0
  %1079 = vmatmul.mubr.f32.gmra.mxu0 %v897
  %v1080 = vpop.f32.mrf.mxu0
  %v1081 = vadd.f32 0.0, %v1080
  %v1082 = vpop.f32.mrf.mxu0
  %1083 = vmatprep.mubr.f32.mxu0 0.0
  %1084 = vmatmul.mubr.f32.gmra.mxu0 %v900
  %v1085 = vpop.f32.mrf.mxu0
  %v1086 = vadd.f32 0.0, %v1085
  %v1087 = vpop.f32.mrf.mxu0
  %1088 = vmatprep.mubr.f32.mxu0 0.0
  %1089 = vmatmul.mubr.f32.gmra.mxu0 %v903
  %v1090 = vpop.f32.mrf.mxu0
  %v1091 = vadd.f32 0.0, %v1090
  %v1092 = vpop.f32.mrf.mxu0
  %1093 = vmatprep.mubr.f32.mxu0 0.0
  %1094 = vmatmul.mubr.f32.gmra.mxu0 %v906
  %v1095 = vpop.f32.mrf.mxu0
  %v1096 = vadd.f32 0.0, %v1095
  %v1097 = vpop.f32.mrf.mxu0
  %1098 = vmatprep.mubr.f32.mxu0 0.0
  %1099 = vmatmul.mubr.f32.gmra.mxu0 %v909
  %v1100 = vpop.f32.mrf.mxu0
  %v1101 = vadd.f32 0.0, %v1100
  %v1102 = vpop.f32.mrf.mxu0
  %1103 = vmatprep.mubr.f32.mxu0 0.0
  %1104 = vmatmul.mubr.f32.gmra.mxu0 %v912
  %v1105 = vpop.f32.mrf.mxu0
  %v1106 = vadd.f32 0.0, %v1105
  %v1107 = vpop.f32.mrf.mxu0
  %1108 = vmatprep.mubr.f32.mxu0 0.0
  %1109 = vmatmul.mubr.f32.gmra.mxu0 %v915
  %v1110 = vpop.f32.mrf.mxu0
  %v1111 = vadd.f32 0.0, %v1110
  %v1112 = vpop.f32.mrf.mxu0
  %1113 = vmatprep.mubr.f32.mxu0 0.0
  %1114 = vmatmul.mubr.f32.gmra.mxu0 %v918
  %v1115 = vpop.f32.mrf.mxu0
  %v1116 = vadd.f32 0.0, %v1115
  %v1117 = vpop.f32.mrf.mxu0
  %1118 = vmatprep.mubr.f32.mxu0 0.0
  %1119 = vmatmul.mubr.f32.gmra.mxu0 %v921
  %v1120 = vpop.f32.mrf.mxu0
  %v1121 = vadd.f32 0.0, %v1120
  %v1122 = vpop.f32.mrf.mxu0
  %1123 = vmatprep.mubr.f32.mxu0 0.0
  %1124 = vmatmul.mubr.f32.gmra.mxu0 %v924
  %v1125 = vpop.f32.mrf.mxu0
  %v1126 = vadd.f32 0.0, %v1125
  %v1127 = vpop.f32.mrf.mxu0
  %1128 = vmatprep.mubr.f32.mxu0 0.0
  %1129 = vmatmul.mubr.f32.gmra.mxu0 %v927
  %v1130 = vpop.f32.mrf.mxu0
  %v1131 = vadd.f32 0.0, %v1130
  %v1132 = vpop.f32.mrf.mxu0
  %1133 = vmatprep.mubr.f32.mxu0 0.0
  %1134 = vmatmul.mubr.f32.gmra.mxu0 %v930
  %v1135 = vpop.f32.mrf.mxu0
  %v1136 = vadd.f32 0.0, %v1135
  %v1137 = vpop.f32.mrf.mxu0
  %1138 = vmatprep.mubr.f32.mxu0 0.0
  %1139 = vmatmul.mubr.f32.gmra.mxu0 %v933
  %v1140 = vpop.f32.mrf.mxu0
  %v1141 = vadd.f32 0.0, %v1140
  %v1142 = vpop.f32.mrf.mxu0
  %1143 = vmatprep.mubr.f32.mxu0 0.0
  %1144 = vmatmul.mubr.f32.gmra.mxu0 %v936
  %v1145 = vpop.f32.mrf.mxu0
  %v1146 = vadd.f32 0.0, %v1145
  %v1147 = vpop.f32.mrf.mxu0
  %1148 = vmatprep.mubr.f32.mxu0 0.0
  %1149 = vmatmul.mubr.f32.gmra.mxu0 %v939
  %v1150 = vpop.f32.mrf.mxu0
  %v1151 = vadd.f32 0.0, %v1150
  %v1152 = vpop.f32.mrf.mxu0
  %1153 = vmatprep.mubr.f32.mxu0 0.0
  %1154 = vmatmul.mubr.f32.gmra.mxu0 %v942
  %v1155 = vpop.f32.mrf.mxu0
  %v1156 = vadd.f32 0.0, %v1155
  %v1157 = vpop.f32.mrf.mxu0
  %1158 = vmatprep.mubr.f32.mxu0 0.0
  %1159 = vmatmul.mubr.f32.gmra.mxu0 %v945
  %v1160 = vpop.f32.mrf.mxu0
  %v1161 = vadd.f32 0.0, %v1160
  %v1162 = vpop.f32.mrf.mxu0
  %1163 = vmatprep.mubr.f32.mxu0 0.0
  %1164 = vmatmul.mubr.f32.gmra.mxu0 %v948
  %v1165 = vpop.f32.mrf.mxu0
  %v1166 = vadd.f32 0.0, %v1165
  %v1167 = vpop.f32.mrf.mxu0
  %1168 = vmatprep.mubr.f32.mxu0 0.0
  %1169 = vmatmul.mubr.f32.gmra.mxu0 %v951
  %v1170 = vpop.f32.mrf.mxu0
  %v1171 = vadd.f32 0.0, %v1170
  %v1172 = vpop.f32.mrf.mxu0
  %1173 = vmatprep.mubr.f32.mxu0 0.0
  %1174 = vmatmul.mubr.f32.gmra.mxu0 %v954
  %v1175 = vpop.f32.mrf.mxu0
  %v1176 = vadd.f32 0.0, %v1175
  %v1177 = vpop.f32.mrf.mxu0
  %1178 = vmatprep.mubr.f32.mxu0 0.0
  %1179 = vmatmul.mubr.f32.gmra.mxu0 %v957
  %v1180 = vpop.f32.mrf.mxu0
  %v1181 = vadd.f32 0.0, %v1180
  %v1182 = vpop.f32.mrf.mxu0
  %1183 = vdwg.mxu0
  %v1184 = vld [vmem:[#allocation2] sm:$0xff]
  %v1185 = vld [vmem:[#allocation2 + $0x8] sm:$0xff]
  %v1186 = vld [vmem:[#allocation2 + $0x10] sm:$0xff]
  %v1187 = vld [vmem:[#allocation2 + $0x18] sm:$0xff]
  %v1188 = vld [vmem:[#allocation2 + $0x20] sm:$0xff]
  %v1189 = vld [vmem:[#allocation2 + $0x28] sm:$0xff]
  %v1190 = vld [vmem:[#allocation2 + $0x30] sm:$0xff]
  %v1191 = vld [vmem:[#allocation2 + $0x38] sm:$0xff]
  %v1192 = vld [vmem:[#allocation2 + $0x40] sm:$0xff]
  %v1193 = vld [vmem:[#allocation2 + $0x48] sm:$0xff]
  %v1194 = vld [vmem:[#allocation2 + $0x50] sm:$0xff]
  %v1195 = vld [vmem:[#allocation2 + $0x58] sm:$0xff]
  %v1196 = vld [vmem:[#allocation2 + $0x60] sm:$0xff]
  %v1197 = vld [vmem:[#allocation2 + $0x68] sm:$0xff]
  %v1198 = vld [vmem:[#allocation2 + $0x70] sm:$0xff]
  %v1199 = vld [vmem:[#allocation2 + $0x78] sm:$0xff]
  %v1200 = vld [vmem:[#allocation2 + $0x80] sm:$0xff]
  %v1201 = vld [vmem:[#allocation2 + $0x88] sm:$0xff]
  %v1202 = vld [vmem:[#allocation2 + $0x90] sm:$0xff]
  %v1203 = vld [vmem:[#allocation2 + $0x98] sm:$0xff]
  %v1204 = vld [vmem:[#allocation2 + $0xa0] sm:$0xff]
  %v1205 = vld [vmem:[#allocation2 + $0xa8] sm:$0xff]
  %v1206 = vld [vmem:[#allocation2 + $0xb0] sm:$0xff]
  %v1207 = vld [vmem:[#allocation2 + $0xb8] sm:$0xff]
  %v1208 = vld [vmem:[#allocation2 + $0xc0] sm:$0xff]
  %v1209 = vld [vmem:[#allocation2 + $0xc8] sm:$0xff]
  %v1210 = vld [vmem:[#allocation2 + $0xd0] sm:$0xff]
  %v1211 = vld [vmem:[#allocation2 + $0xd8] sm:$0xff]
  %v1212 = vld [vmem:[#allocation2 + $0xe0] sm:$0xff]
  %v1213 = vld [vmem:[#allocation2 + $0xe8] sm:$0xff]
  %v1214 = vld [vmem:[#allocation2 + $0xf0] sm:$0xff]
  %v1215 = vld [vmem:[#allocation2 + $0xf8] sm:$0xff]
  %v1216 = vld [vmem:[%s3] sm:$0xff]
  %v1217 = vld [vmem:[%s3 + $0x8] sm:$0xff]
  %v1218 = vld [vmem:[%s3 + $0x10] sm:$0xff]
  %v1219 = vld [vmem:[%s3 + $0x18] sm:$0xff]
  %v1220 = vld [vmem:[%s3 + $0x20] sm:$0xff]
  %v1221 = vld [vmem:[%s3 + $0x28] sm:$0xff]
  %v1222 = vld [vmem:[%s3 + $0x30] sm:$0xff]
  %v1223 = vld [vmem:[%s3 + $0x38] sm:$0xff]
  %v1224 = vld [vmem:[%s3 + $0x40] sm:$0xff]
  %v1225 = vld [vmem:[%s3 + $0x48] sm:$0xff]
  %v1226 = vld [vmem:[%s3 + $0x50] sm:$0xff]
  %v1227 = vld [vmem:[%s3 + $0x58] sm:$0xff]
  %v1228 = vld [vmem:[%s3 + $0x60] sm:$0xff]
  %v1229 = vld [vmem:[%s3 + $0x68] sm:$0xff]
  %v1230 = vld [vmem:[%s3 + $0x70] sm:$0xff]
  %v1231 = vld [vmem:[%s3 + $0x78] sm:$0xff]
  %v1232 = vld [vmem:[%s3 + $0x80] sm:$0xff]
  %v1233 = vld [vmem:[%s3 + $0x88] sm:$0xff]
  %v1234 = vld [vmem:[%s3 + $0x90] sm:$0xff]
  %v1235 = vld [vmem:[%s3 + $0x98] sm:$0xff]
  %v1236 = vld [vmem:[%s3 + $0xa0] sm:$0xff]
  %v1237 = vld [vmem:[%s3 + $0xa8] sm:$0xff]
  %v1238 = vld [vmem:[%s3 + $0xb0] sm:$0xff]
  %v1239 = vld [vmem:[%s3 + $0xb8] sm:$0xff]
  %v1240 = vld [vmem:[%s3 + $0xc0] sm:$0xff]
  %v1241 = vld [vmem:[%s3 + $0xc8] sm:$0xff]
  %v1242 = vld [vmem:[%s3 + $0xd0] sm:$0xff]
  %v1243 = vld [vmem:[%s3 + $0xd8] sm:$0xff]
  %v1244 = vld [vmem:[%s3 + $0xe0] sm:$0xff]
  %v1245 = vld [vmem:[%s3 + $0xe8] sm:$0xff]
  %v1246 = vld [vmem:[%s3 + $0xf0] sm:$0xff]
  %v1247 = vld [vmem:[%s3 + $0xf8] sm:$0xff]
  %v1248 = vld [vmem:[%s3 + $0x100] sm:$0xff]
  %v1249 = vld [vmem:[%s3 + $0x108] sm:$0xff]
  %v1250 = vld [vmem:[%s3 + $0x110] sm:$0xff]
  %v1251 = vld [vmem:[%s3 + $0x118] sm:$0xff]
  %v1252 = vld [vmem:[%s3 + $0x120] sm:$0xff]
  %v1253 = vld [vmem:[%s3 + $0x128] sm:$0xff]
  %v1254 = vld [vmem:[%s3 + $0x130] sm:$0xff]
  %v1255 = vld [vmem:[%s3 + $0x138] sm:$0xff]
  %v1256 = vld [vmem:[%s3 + $0x140] sm:$0xff]
  %v1257 = vld [vmem:[%s3 + $0x148] sm:$0xff]
  %v1258 = vld [vmem:[%s3 + $0x150] sm:$0xff]
  %v1259 = vld [vmem:[%s3 + $0x158] sm:$0xff]
  %v1260 = vld [vmem:[%s3 + $0x160] sm:$0xff]
  %v1261 = vld [vmem:[%s3 + $0x168] sm:$0xff]
  %v1262 = vld [vmem:[%s3 + $0x170] sm:$0xff]
  %v1263 = vld [vmem:[%s3 + $0x178] sm:$0xff]
  %v1264 = vld [vmem:[%s3 + $0x180] sm:$0xff]
  %v1265 = vld [vmem:[%s3 + $0x188] sm:$0xff]
  %v1266 = vld [vmem:[%s3 + $0x190] sm:$0xff]
  %v1267 = vld [vmem:[%s3 + $0x198] sm:$0xff]
  %v1268 = vld [vmem:[%s3 + $0x1a0] sm:$0xff]
  %v1269 = vld [vmem:[%s3 + $0x1a8] sm:$0xff]
  %v1270 = vld [vmem:[%s3 + $0x1b0] sm:$0xff]
  %v1271 = vld [vmem:[%s3 + $0x1b8] sm:$0xff]
  %v1272 = vld [vmem:[%s3 + $0x1c0] sm:$0xff]
  %v1273 = vld [vmem:[%s3 + $0x1c8] sm:$0xff]
  %v1274 = vld [vmem:[%s3 + $0x1d0] sm:$0xff]
  %v1275 = vld [vmem:[%s3 + $0x1d8] sm:$0xff]
  %v1276 = vld [vmem:[%s3 + $0x1e0] sm:$0xff]
  %v1277 = vld [vmem:[%s3 + $0x1e8] sm:$0xff]
  %v1278 = vld [vmem:[%s3 + $0x1f0] sm:$0xff]
  %v1279 = vld [vmem:[%s3 + $0x1f8] sm:$0xff]
  %1280 = vmatprep.subr.mxu0 0.0
  %1281 = vmatpush1.msra.mxu0 %v1101
  %1282 = vmatprep.subr.mxu0 0.0
  %1283 = vmatpush1.msra.mxu0 %v1096
  %1284 = vmatprep.subr.mxu0 0.0
  %1285 = vmatpush1.msra.mxu0 %v1091
  %1286 = vmatprep.subr.mxu0 0.0
  %1287 = vmatpush1.msra.mxu0 %v1086
  %1288 = vmatprep.subr.mxu0 0.0
  %1289 = vmatpush1.msra.mxu0 %v1081
  %1290 = vmatprep.subr.mxu0 0.0
  %1291 = vmatpush1.msra.mxu0 %v1076
  %1292 = vmatprep.subr.mxu0 0.0
  %1293 = vmatpush1.msra.mxu0 %v1071
  %1294 = vmatprep.subr.mxu0 0.0
  %1295 = vmatpush1.msra.mxu0 %v1066
  %1296 = vmatprep.subr.mxu0 0.0
  %1297 = vmatpush1.msra.mxu0 %v1061
  %1298 = vmatprep.subr.mxu0 0.0
  %1299 = vmatpush1.msra.mxu0 %v1056
  %1300 = vmatprep.subr.mxu0 0.0
  %1301 = vmatpush1.msra.mxu0 %v1051
  %1302 = vmatprep.subr.mxu0 0.0
  %1303 = vmatpush1.msra.mxu0 %v1046
  %1304 = vmatprep.subr.mxu0 0.0
  %1305 = vmatpush1.msra.mxu0 %v1041
  %1306 = vmatprep.subr.mxu0 0.0
  %1307 = vmatpush1.msra.mxu0 %v1036
  %1308 = vmatprep.subr.mxu0 0.0
  %1309 = vmatpush1.msra.mxu0 %v1031
  %1310 = vmatprep.subr.mxu0 0.0
  %1311 = vmatpush1.msra.mxu0 %v1026
  %1312 = vmatprep.subr.mxu0 0.0
  %1313 = vmatpush2.msra.mxu0 %v1181
  %1314 = vmatprep.subr.mxu0 0.0
  %1315 = vmatpush2.msra.mxu0 %v1176
  %1316 = vmatprep.subr.mxu0 0.0
  %1317 = vmatpush2.msra.mxu0 %v1171
  %1318 = vmatprep.subr.mxu0 0.0
  %1319 = vmatpush2.msra.mxu0 %v1166
  %1320 = vmatprep.subr.mxu0 0.0
  %1321 = vmatpush2.msra.mxu0 %v1161
  %1322 = vmatprep.subr.mxu0 0.0
  %1323 = vmatpush2.msra.mxu0 %v1156
  %1324 = vmatprep.subr.mxu0 0.0
  %1325 = vmatpush2.msra.mxu0 %v1151
  %1326 = vmatprep.subr.mxu0 0.0
  %1327 = vmatpush2.msra.mxu0 %v1146
  %1328 = vmatprep.subr.mxu0 0.0
  %1329 = vmatpush2.msra.mxu0 %v1141
  %1330 = vmatprep.subr.mxu0 0.0
  %1331 = vmatpush2.msra.mxu0 %v1136
  %1332 = vmatprep.subr.mxu0 0.0
  %1333 = vmatpush2.msra.mxu0 %v1131
  %1334 = vmatprep.subr.mxu0 0.0
  %1335 = vmatpush2.msra.mxu0 %v1126
  %1336 = vmatprep.subr.mxu0 0.0
  %1337 = vmatpush2.msra.mxu0 %v1121
  %1338 = vmatprep.subr.mxu0 0.0
  %1339 = vmatpush2.msra.mxu0 %v1116
  %1340 = vmatprep.subr.mxu0 0.0
  %1341 = vmatpush2.msra.mxu0 %v1111
  %1342 = vmatprep.subr.mxu0 0.0
  %1343 = vmatpush2.msra.mxu0 %v1106
  %1344 = vmatprep.mubr.f32.mxu0 %v1217
  %1345 = vmatmul.mubr.f32.gmra.mxu0 %v1216
  %v1346 = vpop.f32.mrf.mxu0
  %v1347 = vadd.f32 0.0, %v1346
  %v1348 = vpop.f32.mrf.mxu0
  %1349 = vmatprep.mubr.f32.mxu0 %v1219
  %1350 = vmatmul.mubr.f32.gmra.mxu0 %v1218
  %v1351 = vpop.f32.mrf.mxu0
  %v1352 = vadd.f32 0.0, %v1351
  %v1353 = vpop.f32.mrf.mxu0
  %1354 = vmatprep.mubr.f32.mxu0 %v1221
  %1355 = vmatmul.mubr.f32.gmra.mxu0 %v1220
  %v1356 = vpop.f32.mrf.mxu0
  %v1357 = vadd.f32 0.0, %v1356
  %v1358 = vpop.f32.mrf.mxu0
  %1359 = vmatprep.mubr.f32.mxu0 %v1223
  %1360 = vmatmul.mubr.f32.gmra.mxu0 %v1222
  %v1361 = vpop.f32.mrf.mxu0
  %v1362 = vadd.f32 0.0, %v1361
  %v1363 = vpop.f32.mrf.mxu0
  %1364 = vmatprep.mubr.f32.mxu0 %v1225
  %1365 = vmatmul.mubr.f32.gmra.mxu0 %v1224
  %v1366 = vpop.f32.mrf.mxu0
  %v1367 = vadd.f32 0.0, %v1366
  %v1368 = vpop.f32.mrf.mxu0
  %1369 = vmatprep.mubr.f32.mxu0 %v1227
  %1370 = vmatmul.mubr.f32.gmra.mxu0 %v1226
  %v1371 = vpop.f32.mrf.mxu0
  %v1372 = vadd.f32 0.0, %v1371
  %v1373 = vpop.f32.mrf.mxu0
  %1374 = vmatprep.mubr.f32.mxu0 %v1229
  %1375 = vmatmul.mubr.f32.gmra.mxu0 %v1228
  %v1376 = vpop.f32.mrf.mxu0
  %v1377 = vadd.f32 0.0, %v1376
  %v1378 = vpop.f32.mrf.mxu0
  %1379 = vmatprep.mubr.f32.mxu0 %v1231
  %1380 = vmatmul.mubr.f32.gmra.mxu0 %v1230
  %v1381 = vpop.f32.mrf.mxu0
  %v1382 = vadd.f32 0.0, %v1381
  %v1383 = vpop.f32.mrf.mxu0
  %1384 = vmatprep.mubr.f32.mxu0 %v1233
  %1385 = vmatmul.mubr.f32.gmra.mxu0 %v1232
  %v1386 = vpop.f32.mrf.mxu0
  %v1387 = vadd.f32 0.0, %v1386
  %v1388 = vpop.f32.mrf.mxu0
  %1389 = vmatprep.mubr.f32.mxu0 %v1235
  %1390 = vmatmul.mubr.f32.gmra.mxu0 %v1234
  %v1391 = vpop.f32.mrf.mxu0
  %v1392 = vadd.f32 0.0, %v1391
  %v1393 = vpop.f32.mrf.mxu0
  %1394 = vmatprep.mubr.f32.mxu0 %v1237
  %1395 = vmatmul.mubr.f32.gmra.mxu0 %v1236
  %v1396 = vpop.f32.mrf.mxu0
  %v1397 = vadd.f32 0.0, %v1396
  %v1398 = vpop.f32.mrf.mxu0
  %1399 = vmatprep.mubr.f32.mxu0 %v1239
  %1400 = vmatmul.mubr.f32.gmra.mxu0 %v1238
  %v1401 = vpop.f32.mrf.mxu0
  %v1402 = vadd.f32 0.0, %v1401
  %v1403 = vpop.f32.mrf.mxu0
  %1404 = vmatprep.mubr.f32.mxu0 %v1241
  %1405 = vmatmul.mubr.f32.gmra.mxu0 %v1240
  %v1406 = vpop.f32.mrf.mxu0
  %v1407 = vadd.f32 0.0, %v1406
  %v1408 = vpop.f32.mrf.mxu0
  %1409 = vmatprep.mubr.f32.mxu0 %v1243
  %1410 = vmatmul.mubr.f32.gmra.mxu0 %v1242
  %v1411 = vpop.f32.mrf.mxu0
  %v1412 = vadd.f32 0.0, %v1411
  %v1413 = vpop.f32.mrf.mxu0
  %1414 = vmatprep.mubr.f32.mxu0 %v1245
  %1415 = vmatmul.mubr.f32.gmra.mxu0 %v1244
  %v1416 = vpop.f32.mrf.mxu0
  %v1417 = vadd.f32 0.0, %v1416
  %v1418 = vpop.f32.mrf.mxu0
  %1419 = vmatprep.mubr.f32.mxu0 %v1247
  %1420 = vmatmul.mubr.f32.gmra.mxu0 %v1246
  %v1421 = vpop.f32.mrf.mxu0
  %v1422 = vadd.f32 0.0, %v1421
  %v1423 = vpop.f32.mrf.mxu0
  %1424 = vmatprep.mubr.f32.mxu0 %v1249
  %1425 = vmatmul.mubr.f32.gmra.mxu0 %v1248
  %v1426 = vpop.f32.mrf.mxu0
  %v1427 = vadd.f32 0.0, %v1426
  %v1428 = vpop.f32.mrf.mxu0
  %1429 = vmatprep.mubr.f32.mxu0 %v1251
  %1430 = vmatmul.mubr.f32.gmra.mxu0 %v1250
  %v1431 = vpop.f32.mrf.mxu0
  %v1432 = vadd.f32 0.0, %v1431
  %v1433 = vpop.f32.mrf.mxu0
  %1434 = vmatprep.mubr.f32.mxu0 %v1253
  %1435 = vmatmul.mubr.f32.gmra.mxu0 %v1252
  %v1436 = vpop.f32.mrf.mxu0
  %v1437 = vadd.f32 0.0, %v1436
  %v1438 = vpop.f32.mrf.mxu0
  %1439 = vmatprep.mubr.f32.mxu0 %v1255
  %1440 = vmatmul.mubr.f32.gmra.mxu0 %v1254
  %v1441 = vpop.f32.mrf.mxu0
  %v1442 = vadd.f32 0.0, %v1441
  %v1443 = vpop.f32.mrf.mxu0
  %1444 = vmatprep.mubr.f32.mxu0 %v1257
  %1445 = vmatmul.mubr.f32.gmra.mxu0 %v1256
  %v1446 = vpop.f32.mrf.mxu0
  %v1447 = vadd.f32 0.0, %v1446
  %v1448 = vpop.f32.mrf.mxu0
  %1449 = vmatprep.mubr.f32.mxu0 %v1259
  %1450 = vmatmul.mubr.f32.gmra.mxu0 %v1258
  %v1451 = vpop.f32.mrf.mxu0
  %v1452 = vadd.f32 0.0, %v1451
  %v1453 = vpop.f32.mrf.mxu0
  %1454 = vmatprep.mubr.f32.mxu0 %v1261
  %1455 = vmatmul.mubr.f32.gmra.mxu0 %v1260
  %v1456 = vpop.f32.mrf.mxu0
  %v1457 = vadd.f32 0.0, %v1456
  %v1458 = vpop.f32.mrf.mxu0
  %1459 = vmatprep.mubr.f32.mxu0 %v1263
  %1460 = vmatmul.mubr.f32.gmra.mxu0 %v1262
  %v1461 = vpop.f32.mrf.mxu0
  %v1462 = vadd.f32 0.0, %v1461
  %v1463 = vpop.f32.mrf.mxu0
  %1464 = vmatprep.mubr.f32.mxu0 %v1265
  %1465 = vmatmul.mubr.f32.gmra.mxu0 %v1264
  %v1466 = vpop.f32.mrf.mxu0
  %v1467 = vadd.f32 0.0, %v1466
  %v1468 = vpop.f32.mrf.mxu0
  %1469 = vmatprep.mubr.f32.mxu0 %v1267
  %1470 = vmatmul.mubr.f32.gmra.mxu0 %v1266
  %v1471 = vpop.f32.mrf.mxu0
  %v1472 = vadd.f32 0.0, %v1471
  %v1473 = vpop.f32.mrf.mxu0
  %1474 = vmatprep.mubr.f32.mxu0 %v1269
  %1475 = vmatmul.mubr.f32.gmra.mxu0 %v1268
  %v1476 = vpop.f32.mrf.mxu0
  %v1477 = vadd.f32 0.0, %v1476
  %v1478 = vpop.f32.mrf.mxu0
  %1479 = vmatprep.mubr.f32.mxu0 %v1271
  %1480 = vmatmul.mubr.f32.gmra.mxu0 %v1270
  %v1481 = vpop.f32.mrf.mxu0
  %v1482 = vadd.f32 0.0, %v1481
  %v1483 = vpop.f32.mrf.mxu0
  %1484 = vmatprep.mubr.f32.mxu0 %v1273
  %1485 = vmatmul.mubr.f32.gmra.mxu0 %v1272
  %v1486 = vpop.f32.mrf.mxu0
  %v1487 = vadd.f32 0.0, %v1486
  %v1488 = vpop.f32.mrf.mxu0
  %1489 = vmatprep.mubr.f32.mxu0 %v1275
  %1490 = vmatmul.mubr.f32.gmra.mxu0 %v1274
  %v1491 = vpop.f32.mrf.mxu0
  %v1492 = vadd.f32 0.0, %v1491
  %v1493 = vpop.f32.mrf.mxu0
  %1494 = vmatprep.mubr.f32.mxu0 %v1277
  %1495 = vmatmul.mubr.f32.gmra.mxu0 %v1276
  %v1496 = vpop.f32.mrf.mxu0
  %v1497 = vadd.f32 0.0, %v1496
  %v1498 = vpop.f32.mrf.mxu0
  %1499 = vmatprep.mubr.f32.mxu0 %v1279
  %1500 = vmatmul.mubr.f32.gmra.mxu0 %v1278
  %v1501 = vpop.f32.mrf.mxu0
  %v1502 = vadd.f32 0.0, %v1501
  %v1503 = vpop.f32.mrf.mxu0
  %1504 = vdwg.mxu0
  %v1505 = vadd.f32 %v1184, %v1347
  %v1506 = vadd.f32 %v1185, %v1352
  %v1507 = vadd.f32 %v1186, %v1357
  %v1508 = vadd.f32 %v1187, %v1362
  %v1509 = vadd.f32 %v1188, %v1367
  %v1510 = vadd.f32 %v1189, %v1372
  %v1511 = vadd.f32 %v1190, %v1377
  %v1512 = vadd.f32 %v1191, %v1382
  %v1513 = vadd.f32 %v1192, %v1387
  %v1514 = vadd.f32 %v1193, %v1392
  %v1515 = vadd.f32 %v1194, %v1397
  %v1516 = vadd.f32 %v1195, %v1402
  %v1517 = vadd.f32 %v1196, %v1407
  %v1518 = vadd.f32 %v1197, %v1412
  %v1519 = vadd.f32 %v1198, %v1417
  %v1520 = vadd.f32 %v1199, %v1422
  %v1521 = vadd.f32 %v1200, %v1427
  %v1522 = vadd.f32 %v1201, %v1432
  %v1523 = vadd.f32 %v1202, %v1437
  %v1524 = vadd.f32 %v1203, %v1442
  %v1525 = vadd.f32 %v1204, %v1447
  %v1526 = vadd.f32 %v1205, %v1452
  %v1527 = vadd.f32 %v1206, %v1457
  %v1528 = vadd.f32 %v1207, %v1462
  %v1529 = vadd.f32 %v1208, %v1467
  %v1530 = vadd.f32 %v1209, %v1472
  %v1531 = vadd.f32 %v1210, %v1477
  %v1532 = vadd.f32 %v1211, %v1482
  %v1533 = vadd.f32 %v1212, %v1487
  %v1534 = vadd.f32 %v1213, %v1492
  %v1535 = vadd.f32 %v1214, %v1497
  %v1536 = vadd.f32 %v1215, %v1502
  %vm1537 = vcmask 261120
  %1538 = vst.msk [vmem:[#allocation2] sm:$0xff] %vm1537, %v1505
  %1539 = vst.msk [vmem:[#allocation2 + $0x8] sm:$0xff] %vm1537, %v1506
  %1540 = vst.msk [vmem:[#allocation2 + $0x10] sm:$0xff] %vm1537, %v1507
  %1541 = vst.msk [vmem:[#allocation2 + $0x18] sm:$0xff] %vm1537, %v1508
  %1542 = vst.msk [vmem:[#allocation2 + $0x20] sm:$0xff] %vm1537, %v1509
  %1543 = vst.msk [vmem:[#allocation2 + $0x28] sm:$0xff] %vm1537, %v1510
  %1544 = vst.msk [vmem:[#allocation2 + $0x30] sm:$0xff] %vm1537, %v1511
  %1545 = vst.msk [vmem:[#allocation2 + $0x38] sm:$0xff] %vm1537, %v1512
  %1546 = vst.msk [vmem:[#allocation2 + $0x40] sm:$0xff] %vm1537, %v1513
  %1547 = vst.msk [vmem:[#allocation2 + $0x48] sm:$0xff] %vm1537, %v1514
  %1548 = vst.msk [vmem:[#allocation2 + $0x50] sm:$0xff] %vm1537, %v1515
  %1549 = vst.msk [vmem:[#allocation2 + $0x58] sm:$0xff] %vm1537, %v1516
  %1550 = vst.msk [vmem:[#allocation2 + $0x60] sm:$0xff] %vm1537, %v1517
  %1551 = vst.msk [vmem:[#allocation2 + $0x68] sm:$0xff] %vm1537, %v1518
  %1552 = vst.msk [vmem:[#allocation2 + $0x70] sm:$0xff] %vm1537, %v1519
  %1553 = vst.msk [vmem:[#allocation2 + $0x78] sm:$0xff] %vm1537, %v1520
  %1554 = vst.msk [vmem:[#allocation2 + $0x80] sm:$0xff] %vm1537, %v1521
  %1555 = vst.msk [vmem:[#allocation2 + $0x88] sm:$0xff] %vm1537, %v1522
  %1556 = vst.msk [vmem:[#allocation2 + $0x90] sm:$0xff] %vm1537, %v1523
  %1557 = vst.msk [vmem:[#allocation2 + $0x98] sm:$0xff] %vm1537, %v1524
  %1558 = vst.msk [vmem:[#allocation2 + $0xa0] sm:$0xff] %vm1537, %v1525
  %1559 = vst.msk [vmem:[#allocation2 + $0xa8] sm:$0xff] %vm1537, %v1526
  %1560 = vst.msk [vmem:[#allocation2 + $0xb0] sm:$0xff] %vm1537, %v1527
  %1561 = vst.msk [vmem:[#allocation2 + $0xb8] sm:$0xff] %vm1537, %v1528
  %1562 = vst.msk [vmem:[#allocation2 + $0xc0] sm:$0xff] %vm1537, %v1529
  %1563 = vst.msk [vmem:[#allocation2 + $0xc8] sm:$0xff] %vm1537, %v1530
  %1564 = vst.msk [vmem:[#allocation2 + $0xd0] sm:$0xff] %vm1537, %v1531
  %1565 = vst.msk [vmem:[#allocation2 + $0xd8] sm:$0xff] %vm1537, %v1532
  %1566 = vst.msk [vmem:[#allocation2 + $0xe0] sm:$0xff] %vm1537, %v1533
  %1567 = vst.msk [vmem:[#allocation2 + $0xe8] sm:$0xff] %vm1537, %v1534
  %1568 = vst.msk [vmem:[#allocation2 + $0xf0] sm:$0xff] %vm1537, %v1535
  %1569 = vst.msk [vmem:[#allocation2 + $0xf8] sm:$0xff] %vm1537, %v1536
  // Predicated region
  $region26: #{tpu_custom_call.1} parent=0 // pred_check
    %p1570 = pneg %p20
  $region27: #{tpu_custom_call.1} parent=0 // pred_check_branch
    %1572 = sbr.rel (%p1570) target = $region29
  $region28: #{tpu_custom_call.1} parent=0 // pred_region
    %v1573 = vld [vmem:[#allocation2] sm:$0xff]
    %v1574 = vld [vmem:[#allocation2 + $0x8] sm:$0xff]
    %v1575 = vld [vmem:[#allocation2 + $0x10] sm:$0xff]
    %v1576 = vld [vmem:[#allocation2 + $0x18] sm:$0xff]
    %v1577 = vld [vmem:[#allocation2 + $0x20] sm:$0xff]
    %v1578 = vld [vmem:[#allocation2 + $0x28] sm:$0xff]
    %v1579 = vld [vmem:[#allocation2 + $0x30] sm:$0xff]
    %v1580 = vld [vmem:[#allocation2 + $0x38] sm:$0xff]
    %v1581 = vld [vmem:[#allocation2 + $0x40] sm:$0xff]
    %v1582 = vld [vmem:[#allocation2 + $0x48] sm:$0xff]
    %v1583 = vld [vmem:[#allocation2 + $0x50] sm:$0xff]
    %v1584 = vld [vmem:[#allocation2 + $0x58] sm:$0xff]
    %v1585 = vld [vmem:[#allocation2 + $0x60] sm:$0xff]
    %v1586 = vld [vmem:[#allocation2 + $0x68] sm:$0xff]
    %v1587 = vld [vmem:[#allocation2 + $0x70] sm:$0xff]
    %v1588 = vld [vmem:[#allocation2 + $0x78] sm:$0xff]
    %v1589 = vld [vmem:[#allocation2 + $0x80] sm:$0xff]
    %v1590 = vld [vmem:[#allocation2 + $0x88] sm:$0xff]
    %v1591 = vld [vmem:[#allocation2 + $0x90] sm:$0xff]
    %v1592 = vld [vmem:[#allocation2 + $0x98] sm:$0xff]
    %v1593 = vld [vmem:[#allocation2 + $0xa0] sm:$0xff]
    %v1594 = vld [vmem:[#allocation2 + $0xa8] sm:$0xff]
    %v1595 = vld [vmem:[#allocation2 + $0xb0] sm:$0xff]
    %v1596 = vld [vmem:[#allocation2 + $0xb8] sm:$0xff]
    %v1597 = vld [vmem:[#allocation2 + $0xc0] sm:$0xff]
    %v1598 = vld [vmem:[#allocation2 + $0xc8] sm:$0xff]
    %v1599 = vld [vmem:[#allocation2 + $0xd0] sm:$0xff]
    %v1600 = vld [vmem:[#allocation2 + $0xd8] sm:$0xff]
    %v1601 = vld [vmem:[#allocation2 + $0xe0] sm:$0xff]
    %v1602 = vld [vmem:[#allocation2 + $0xe8] sm:$0xff]
    %v1603 = vld [vmem:[#allocation2 + $0xf0] sm:$0xff]
    %v1604 = vld [vmem:[#allocation2 + $0xf8] sm:$0xff]
    %1605 = vst.msk [vmem:[%s5] sm:$0xff] %vm1537, %v1573
    %1606 = vst.msk [vmem:[%s5 + $0x8] sm:$0xff] %vm1537, %v1574
    %1607 = vst.msk [vmem:[%s5 + $0x10] sm:$0xff] %vm1537, %v1575
    %1608 = vst.msk [vmem:[%s5 + $0x18] sm:$0xff] %vm1537, %v1576
    %1609 = vst.msk [vmem:[%s5 + $0x20] sm:$0xff] %vm1537, %v1577
    %1610 = vst.msk [vmem:[%s5 + $0x28] sm:$0xff] %vm1537, %v1578
    %1611 = vst.msk [vmem:[%s5 + $0x30] sm:$0xff] %vm1537, %v1579
    %1612 = vst.msk [vmem:[%s5 + $0x38] sm:$0xff] %vm1537, %v1580
    %1613 = vst.msk [vmem:[%s5 + $0x40] sm:$0xff] %vm1537, %v1581
    %1614 = vst.msk [vmem:[%s5 + $0x48] sm:$0xff] %vm1537, %v1582
    %1615 = vst.msk [vmem:[%s5 + $0x50] sm:$0xff] %vm1537, %v1583
    %1616 = vst.msk [vmem:[%s5 + $0x58] sm:$0xff] %vm1537, %v1584
    %1617 = vst.msk [vmem:[%s5 + $0x60] sm:$0xff] %vm1537, %v1585
    %1618 = vst.msk [vmem:[%s5 + $0x68] sm:$0xff] %vm1537, %v1586
    %1619 = vst.msk [vmem:[%s5 + $0x70] sm:$0xff] %vm1537, %v1587
    %1620 = vst.msk [vmem:[%s5 + $0x78] sm:$0xff] %vm1537, %v1588
    %1621 = vst.msk [vmem:[%s5 + $0x80] sm:$0xff] %vm1537, %v1589
    %1622 = vst.msk [vmem:[%s5 + $0x88] sm:$0xff] %vm1537, %v1590
    %1623 = vst.msk [vmem:[%s5 + $0x90] sm:$0xff] %vm1537, %v1591
    %1624 = vst.msk [vmem:[%s5 + $0x98] sm:$0xff] %vm1537, %v1592
    %1625 = vst.msk [vmem:[%s5 + $0xa0] sm:$0xff] %vm1537, %v1593
    %1626 = vst.msk [vmem:[%s5 + $0xa8] sm:$0xff] %vm1537, %v1594
    %1627 = vst.msk [vmem:[%s5 + $0xb0] sm:$0xff] %vm1537, %v1595
    %1628 = vst.msk [vmem:[%s5 + $0xb8] sm:$0xff] %vm1537, %v1596
    %1629 = vst.msk [vmem:[%s5 + $0xc0] sm:$0xff] %vm1537, %v1597
    %1630 = vst.msk [vmem:[%s5 + $0xc8] sm:$0xff] %vm1537, %v1598
    %1631 = vst.msk [vmem:[%s5 + $0xd0] sm:$0xff] %vm1537, %v1599
    %1632 = vst.msk [vmem:[%s5 + $0xd8] sm:$0xff] %vm1537, %v1600
    %1633 = vst.msk [vmem:[%s5 + $0xe0] sm:$0xff] %vm1537, %v1601
    %1634 = vst.msk [vmem:[%s5 + $0xe8] sm:$0xff] %vm1537, %v1602
    %1635 = vst.msk [vmem:[%s5 + $0xf0] sm:$0xff] %vm1537, %v1603
    %1636 = vst.msk [vmem:[%s5 + $0xf8] sm:$0xff] %vm1537, %v1604
  $region29: #{tpu_custom_call.1} parent=0 // pred_fallthru
    _
  // Predicated region
  $region30: #{tpu_custom_call.1} parent=0 // pred_check
    _
  $region31: #{tpu_custom_call.1} parent=0 // pred_check_branch
    %1638 = sbr.rel (0) target = $region33
  $region32: #{tpu_custom_call.1} parent=0 // pred_region
    _
  $region33: #{tpu_custom_call.1} parent=0 // pred_fallthru
    _
  // Predicated region
  $region34: #{tpu_custom_call.1} parent=0 // pred_check
    _
  $region35: #{tpu_custom_call.1} parent=0 // pred_check_branch
    %1640 = sbr.rel (0) target = $region37
  $region36: #{tpu_custom_call.1} parent=0 // pred_region
    _
  $region37: #{tpu_custom_call.1} parent=0 // pred_fallthru
    _

</llo_original>
